<compile_context>
chip_gen: v7x
topology: tpu7x:2x2x1
jax: 0.10.0
libtpu: 0.0.40
codegen_flags: <defaults>
</compile_context>

<pallas_src>
import math

import jax
import jax.numpy as jnp
from jax.experimental import pallas as pl
from jax.experimental.pallas import tpu as pltpu

Z_DIM = 128
HIDDEN = 512


def _round_up(x, m):
    return ((x + m - 1) // m) * m


def adversary_kernel(z_ref,
                     w1_ref, b1_ref,
                     w2_ref, b2_ref,
                     w3_ref, b3_ref,
                     w4_ref, b4_ref,
                     w5_ref, b5_ref,
                     o_ref):
    # Layer 1: f32 z tile cast to bf16 at the MXU input (in-kernel, VPU slot);
    # f32 accumulation, bias + ReLU in f32.
    z_bf16 = z_ref[...].astype(jnp.bfloat16)
    h = jnp.dot(z_bf16, w1_ref[...], preferred_element_type=jnp.float32)
    h = jnp.maximum(h + b1_ref[...], 0.0)

    # Layers 2-4: cast activations to bf16 only at the MXU input.
    for w_ref, b_ref in ((w2_ref, b2_ref), (w3_ref, b3_ref), (w4_ref, b4_ref)):
        h = jnp.dot(h.astype(jnp.bfloat16), w_ref[...],
                    preferred_element_type=jnp.float32)
        h = jnp.maximum(h + b_ref[...], 0.0)

    # Output layer (512 -> 1): N=1 matmul replaced by VPU multiply + lane
    # reduction; bias is a scalar read from SMEM.
    w5_row = w5_ref[...].astype(jnp.float32)                 # (1, 512)
    o_ref[...] = jnp.sum(h * w5_row, axis=-1, keepdims=True) + b5_ref[0, 0]


def _choose_tile(B, tile_b_max):
    """Batch tile: multiple of 16, sized so padding is <16 rows and the grid
    has at least 2 steps for B >= 32 (keeps both v7x TensorCores busy)."""
    if B < 32:
        return _round_up(B, 16)
    n_tiles = max(2, pl.cdiv(B, tile_b_max))
    return _round_up(pl.cdiv(B, n_tiles), 16)


def adversary_forward(z, params, tile_b_max=1024):
    """Run the Adversary MLP forward pass with a batch-tiled Pallas kernel."""
    (w1, b1), (w2, b2), (w3, b3), (w4, b4), (w5, b5) = params
    B = z.shape[0]

    tile_b = _choose_tile(B, tile_b_max)
    Bp = _round_up(B, tile_b)
    if Bp != B:
        z = jnp.pad(z, ((0, Bp - B), (0, 0)))

    grid = (Bp // tile_b,)

    flops = 2 * Bp * (Z_DIM * HIDDEN + 3 * HIDDEN * HIDDEN + HIDDEN)
    bytes_accessed = (
        (Z_DIM * HIDDEN + 3 * HIDDEN * HIDDEN + HIDDEN) * 2   # bf16 weights
        + (4 * HIDDEN + 1) * 4                                # f32 biases
        + Bp * Z_DIM * 4                                      # f32 input
        + Bp * 1 * 4                                          # f32 output
    )

    resident = lambda i: (0, 0)   # weights/biases: same block every grid step

    out = pl.pallas_call(
        adversary_kernel,
        out_shape=jax.ShapeDtypeStruct((Bp, 1), jnp.float32),
        grid=grid,
        in_specs=[
            pl.BlockSpec((tile_b, Z_DIM), lambda i: (i, 0)),      # z tile (f32)
            pl.BlockSpec((Z_DIM, HIDDEN), resident),              # w1
            pl.BlockSpec((1, HIDDEN), resident),                  # b1
            pl.BlockSpec((HIDDEN, HIDDEN), resident),              # w2
            pl.BlockSpec((1, HIDDEN), resident),                   # b2
            pl.BlockSpec((HIDDEN, HIDDEN), resident),              # w3
            pl.BlockSpec((1, HIDDEN), resident),                   # b3
            pl.BlockSpec((HIDDEN, HIDDEN), resident),              # w4
            pl.BlockSpec((1, HIDDEN), resident),                   # b4
            pl.BlockSpec((1, HIDDEN), resident),                   # w5 (row)
            pl.BlockSpec(memory_space=pltpu.MemorySpace.SMEM),     # b5 scalar
        ],
        out_specs=pl.BlockSpec((tile_b, 1), lambda i: (i, 0)),
        compiler_params=pltpu.CompilerParams(
            dimension_semantics=("parallel",),
            vmem_limit_bytes=48 * 1024 * 1024),
        cost_estimate=pl.CostEstimate(
            flops=flops, transcendentals=0, bytes_accessed=bytes_accessed),
    )(z, w1, b1, w2, b2, w3, b3, w4, b4, w5, b5)

    return out[:B]


def init_params(key):
    """kaiming_normal (fan_in, relu gain) init; biases = 0.

    Weights stored transposed as (in, out) in bf16; biases kept in f32.
    The 512->1 output weight is stored as a (1, 512) row for the VPU reduction;
    its bias is a (1, 1) f32 scalar (placed in SMEM by the kernel).
    """
    dims = [(Z_DIM, HIDDEN), (HIDDEN, HIDDEN), (HIDDEN, HIDDEN),
            (HIDDEN, HIDDEN), (HIDDEN, 1)]
    params = []
    keys = jax.random.split(key, len(dims))
    for idx, (k, (fan_in, fan_out)) in enumerate(zip(keys, dims)):
        std = math.sqrt(2.0 / fan_in)
        w = jax.random.normal(k, (fan_in, fan_out), dtype=jnp.float32) * std
        if idx == len(dims) - 1:
            w = w.reshape(1, fan_in)                      # (1, 512) row
            b = jnp.zeros((1, 1), dtype=jnp.float32)      # scalar bias (SMEM)
        else:
            b = jnp.zeros((1, fan_out), dtype=jnp.float32)
        params.append((w.astype(jnp.bfloat16), b))
    return params


def adversary_reference(z, params):
    """Plain-JAX reference that mirrors the kernel's bf16-in / f32-acc math."""
    (w1, b1), (w2, b2), (w3, b3), (w4, b4), (w5, b5) = params
    h = z.astype(jnp.bfloat16).astype(jnp.float32)
    h = jnp.maximum(h @ w1.astype(jnp.float32) + b1, 0.0)
    for w, b in ((w2, b2), (w3, b3), (w4, b4)):
        h = h.astype(jnp.bfloat16).astype(jnp.float32)
        h = jnp.maximum(h @ w.astype(jnp.float32) + b, 0.0)
    return h @ w5.astype(jnp.float32).T + b5


if __name__ == "__main__":
    key = jax.random.PRNGKey(0)
    k_param, k_z = jax.random.split(key)

    params = init_params(k_param)

    # Small-batch case (single 16-row tile, grid of 1).
    B = 8
    z = jax.random.normal(k_z, (B, Z_DIM), dtype=jnp.float32)
    out = jax.block_until_ready(adversary_forward(z, params))
    ref = adversary_reference(z, params)
    assert out.shape == (B, 1), out.shape
    assert jnp.allclose(out, ref, atol=2e-2, rtol=2e-2), "mismatch vs reference (B=8)"

    # Ragged batch exercising the >=2-step grid + minimal padding path
    # (B=300 -> tile_b=160, grid=2, only 20 padded rows).
    B2 = 300
    z2 = jax.random.normal(jax.random.PRNGKey(1), (B2, Z_DIM), dtype=jnp.float32)
    out2 = jax.block_until_ready(adversary_forward(z2, params))
    ref2 = adversary_reference(z2, params)
    assert out2.shape == (B2, 1), out2.shape
    assert jnp.allclose(out2, ref2, atol=2e-2, rtol=2e-2), "mismatch vs reference (B=300)"

    print("KERNEL_OK")
</pallas_src>

<mosaic_0001>
module attributes {stable_mosaic.version = 11 : i64} {
  func.func @adversary_kernel(%arg0: i32, %arg1: memref<16x128xf32, #tpu.memory_space<vmem>>, %arg2: memref<128x512xbf16, #tpu.memory_space<vmem>>, %arg3: memref<1x512xf32, #tpu.memory_space<vmem>>, %arg4: memref<512x512xbf16, #tpu.memory_space<vmem>>, %arg5: memref<1x512xf32, #tpu.memory_space<vmem>>, %arg6: memref<512x512xbf16, #tpu.memory_space<vmem>>, %arg7: memref<1x512xf32, #tpu.memory_space<vmem>>, %arg8: memref<512x512xbf16, #tpu.memory_space<vmem>>, %arg9: memref<1x512xf32, #tpu.memory_space<vmem>>, %arg10: memref<1x512xbf16, #tpu.memory_space<vmem>>, %arg11: memref<1x1xf32, #tpu.memory_space<smem>>, %arg12: memref<16x1xf32, #tpu.memory_space<vmem>>) attributes {dimension_semantics = [#tpu.dimension_semantics<parallel>], iteration_bounds = array<i64: 1>, scalar_prefetch = 0 : i64, scratch_operands = 0 : i64, tpu.core_type = #tpu.core_type<tc>, window_params = [{transform_indices = @transform_0, window_bounds = array<i64: 16, 128>}, {pipeline_mode = #tpu.pipeline_mode<synchronous>, transform_indices = @transform_1, window_bounds = array<i64: 128, 512>}, {pipeline_mode = #tpu.pipeline_mode<synchronous>, transform_indices = @transform_2, window_bounds = array<i64: 1, 512>}, {pipeline_mode = #tpu.pipeline_mode<synchronous>, transform_indices = @transform_3, window_bounds = array<i64: 512, 512>}, {pipeline_mode = #tpu.pipeline_mode<synchronous>, transform_indices = @transform_4, window_bounds = array<i64: 1, 512>}, {pipeline_mode = #tpu.pipeline_mode<synchronous>, transform_indices = @transform_5, window_bounds = array<i64: 512, 512>}, {pipeline_mode = #tpu.pipeline_mode<synchronous>, transform_indices = @transform_6, window_bounds = array<i64: 1, 512>}, {pipeline_mode = #tpu.pipeline_mode<synchronous>, transform_indices = @transform_7, window_bounds = array<i64: 512, 512>}, {pipeline_mode = #tpu.pipeline_mode<synchronous>, transform_indices = @transform_8, window_bounds = array<i64: 1, 512>}, {pipeline_mode = #tpu.pipeline_mode<synchronous>, transform_indices = @transform_9, window_bounds = array<i64: 1, 512>}, {transform_indices = @transform_10, window_bounds = array<i64: 1, 1>}, {transform_indices = @transform_11, window_bounds = array<i64: 16, 1>}]} {
    %c0 = arith.constant 0 : index
    %c0_0 = arith.constant 0 : index
    %0 = vector.load %arg1[%c0, %c0_0] : memref<16x128xf32, #tpu.memory_space<vmem>>, vector<16x128xf32>
    %1 = arith.truncf %0 : vector<16x128xf32> to vector<16x128xbf16>
    %c0_1 = arith.constant 0 : index
    %c0_2 = arith.constant 0 : index
    %2 = vector.load %arg2[%c0_1, %c0_2] : memref<128x512xbf16, #tpu.memory_space<vmem>>, vector<128x512xbf16>
    %cst = arith.constant dense<0.000000e+00> : vector<16x512xf32>
    %3 = tpu.matmul %1, %2, %cst {dimension_numbers = #tpu.dot_dimension_numbers<[1], [0], [0], [1], [0, 0, 1, 1], [], []>} : vector<16x128xbf16>, vector<128x512xbf16>, vector<16x512xf32> -> vector<16x512xf32>
    %c0_3 = arith.constant 0 : index
    %c0_4 = arith.constant 0 : index
    %4 = vector.load %arg3[%c0_3, %c0_4] : memref<1x512xf32, #tpu.memory_space<vmem>>, vector<1x512xf32>
    %5 = vector.broadcast %4 : vector<1x512xf32> to vector<16x512xf32>
    %6 = arith.addf %3, %5 : vector<16x512xf32>
    %cst_5 = arith.constant 0.000000e+00 : f32
    %7 = vector.broadcast %cst_5 : f32 to vector<16x512xf32>
    %8 = arith.maximumf %6, %7 : vector<16x512xf32>
    %9 = arith.truncf %8 : vector<16x512xf32> to vector<16x512xbf16>
    %c0_6 = arith.constant 0 : index
    %c0_7 = arith.constant 0 : index
    %10 = vector.load %arg4[%c0_6, %c0_7] : memref<512x512xbf16, #tpu.memory_space<vmem>>, vector<512x512xbf16>
    %cst_8 = arith.constant dense<0.000000e+00> : vector<16x512xf32>
    %11 = tpu.matmul %9, %10, %cst_8 {dimension_numbers = #tpu.dot_dimension_numbers<[1], [0], [0], [1], [0, 0, 1, 1], [], []>} : vector<16x512xbf16>, vector<512x512xbf16>, vector<16x512xf32> -> vector<16x512xf32>
    %c0_9 = arith.constant 0 : index
    %c0_10 = arith.constant 0 : index
    %12 = vector.load %arg5[%c0_9, %c0_10] : memref<1x512xf32, #tpu.memory_space<vmem>>, vector<1x512xf32>
    %13 = vector.broadcast %12 : vector<1x512xf32> to vector<16x512xf32>
    %14 = arith.addf %11, %13 : vector<16x512xf32>
    %cst_11 = arith.constant 0.000000e+00 : f32
    %15 = vector.broadcast %cst_11 : f32 to vector<16x512xf32>
    %16 = arith.maximumf %14, %15 : vector<16x512xf32>
    %17 = arith.truncf %16 : vector<16x512xf32> to vector<16x512xbf16>
    %c0_12 = arith.constant 0 : index
    %c0_13 = arith.constant 0 : index
    %18 = vector.load %arg6[%c0_12, %c0_13] : memref<512x512xbf16, #tpu.memory_space<vmem>>, vector<512x512xbf16>
    %cst_14 = arith.constant dense<0.000000e+00> : vector<16x512xf32>
    %19 = tpu.matmul %17, %18, %cst_14 {dimension_numbers = #tpu.dot_dimension_numbers<[1], [0], [0], [1], [0, 0, 1, 1], [], []>} : vector<16x512xbf16>, vector<512x512xbf16>, vector<16x512xf32> -> vector<16x512xf32>
    %c0_15 = arith.constant 0 : index
    %c0_16 = arith.constant 0 : index
    %20 = vector.load %arg7[%c0_15, %c0_16] : memref<1x512xf32, #tpu.memory_space<vmem>>, vector<1x512xf32>
    %21 = vector.broadcast %20 : vector<1x512xf32> to vector<16x512xf32>
    %22 = arith.addf %19, %21 : vector<16x512xf32>
    %cst_17 = arith.constant 0.000000e+00 : f32
    %23 = vector.broadcast %cst_17 : f32 to vector<16x512xf32>
    %24 = arith.maximumf %22, %23 : vector<16x512xf32>
    %25 = arith.truncf %24 : vector<16x512xf32> to vector<16x512xbf16>
    %c0_18 = arith.constant 0 : index
    %c0_19 = arith.constant 0 : index
    %26 = vector.load %arg8[%c0_18, %c0_19] : memref<512x512xbf16, #tpu.memory_space<vmem>>, vector<512x512xbf16>
    %cst_20 = arith.constant dense<0.000000e+00> : vector<16x512xf32>
    %27 = tpu.matmul %25, %26, %cst_20 {dimension_numbers = #tpu.dot_dimension_numbers<[1], [0], [0], [1], [0, 0, 1, 1], [], []>} : vector<16x512xbf16>, vector<512x512xbf16>, vector<16x512xf32> -> vector<16x512xf32>
    %c0_21 = arith.constant 0 : index
    %c0_22 = arith.constant 0 : index
    %28 = vector.load %arg9[%c0_21, %c0_22] : memref<1x512xf32, #tpu.memory_space<vmem>>, vector<1x512xf32>
    %29 = vector.broadcast %28 : vector<1x512xf32> to vector<16x512xf32>
    %30 = arith.addf %27, %29 : vector<16x512xf32>
    %cst_23 = arith.constant 0.000000e+00 : f32
    %31 = vector.broadcast %cst_23 : f32 to vector<16x512xf32>
    %32 = arith.maximumf %30, %31 : vector<16x512xf32>
    %c0_24 = arith.constant 0 : index
    %c0_25 = arith.constant 0 : index
    %33 = vector.load %arg10[%c0_24, %c0_25] : memref<1x512xbf16, #tpu.memory_space<vmem>>, vector<1x512xbf16>
    %34 = arith.extf %33 : vector<1x512xbf16> to vector<1x512xf32>
    %35 = vector.broadcast %34 : vector<1x512xf32> to vector<16x512xf32>
    %36 = arith.mulf %32, %35 : vector<16x512xf32>
    %cst_26 = arith.constant dense<0.000000e+00> : vector<16xf32>
    %37 = vector.multi_reduction <add>, %36, %cst_26 [1] : vector<16x512xf32> to vector<16xf32>
    %38 = vector.shape_cast %37 : vector<16xf32> to vector<16x1xf32>
    %c0_27 = arith.constant 0 : index
    %c0_28 = arith.constant 0 : index
    %39 = memref.load %arg11[%c0_27, %c0_28] : memref<1x1xf32, #tpu.memory_space<smem>>
    %40 = vector.broadcast %39 : f32 to vector<16x1xf32>
    %41 = arith.addf %38, %40 : vector<16x1xf32>
    %c0_29 = arith.constant 0 : index
    %c0_30 = arith.constant 0 : index
    %42 = vector.load %arg12[%c0_29, %c0_30] : memref<16x1xf32, #tpu.memory_space<vmem>>, vector<16x1xf32>
    tpu.vector_store %arg12[%c0_29, %c0_30], %41 {strides = array<i32>} : memref<16x1xf32, #tpu.memory_space<vmem>>, vector<16x1xf32>,
    return
  }
  func.func @transform_0(%arg0: i32) -> (i32, i32) {
    %c0_i32 = arith.constant 0 : i32
    %c0_i32_0 = arith.constant 0 : i32
    return %arg0, %c0_i32 : i32, i32
  }
  func.func @transform_1(%arg0: i32) -> (i32, i32) {
    %c0_i32 = arith.constant 0 : i32
    %c0_i32_0 = arith.constant 0 : i32
    %c0_i32_1 = arith.constant 0 : i32
    return %c0_i32, %c0_i32_0 : i32, i32
  }
  func.func @transform_2(%arg0: i32) -> (i32, i32) {
    %c0_i32 = arith.constant 0 : i32
    %c0_i32_0 = arith.constant 0 : i32
    %c0_i32_1 = arith.constant 0 : i32
    return %c0_i32, %c0_i32_0 : i32, i32
  }
  func.func @transform_3(%arg0: i32) -> (i32, i32) {
    %c0_i32 = arith.constant 0 : i32
    %c0_i32_0 = arith.constant 0 : i32
    %c0_i32_1 = arith.constant 0 : i32
    return %c0_i32, %c0_i32_0 : i32, i32
  }
  func.func @transform_4(%arg0: i32) -> (i32, i32) {
    %c0_i32 = arith.constant 0 : i32
    %c0_i32_0 = arith.constant 0 : i32
    %c0_i32_1 = arith.constant 0 : i32
    return %c0_i32, %c0_i32_0 : i32, i32
  }
  func.func @transform_5(%arg0: i32) -> (i32, i32) {
    %c0_i32 = arith.constant 0 : i32
    %c0_i32_0 = arith.constant 0 : i32
    %c0_i32_1 = arith.constant 0 : i32
    return %c0_i32, %c0_i32_0 : i32, i32
  }
  func.func @transform_6(%arg0: i32) -> (i32, i32) {
    %c0_i32 = arith.constant 0 : i32
    %c0_i32_0 = arith.constant 0 : i32
    %c0_i32_1 = arith.constant 0 : i32
    return %c0_i32, %c0_i32_0 : i32, i32
  }
  func.func @transform_7(%arg0: i32) -> (i32, i32) {
    %c0_i32 = arith.constant 0 : i32
    %c0_i32_0 = arith.constant 0 : i32
    %c0_i32_1 = arith.constant 0 : i32
    return %c0_i32, %c0_i32_0 : i32, i32
  }
  func.func @transform_8(%arg0: i32) -> (i32, i32) {
    %c0_i32 = arith.constant 0 : i32
    %c0_i32_0 = arith.constant 0 : i32
    %c0_i32_1 = arith.constant 0 : i32
    return %c0_i32, %c0_i32_0 : i32, i32
  }
  func.func @transform_9(%arg0: i32) -> (i32, i32) {
    %c0_i32 = arith.constant 0 : i32
    %c0_i32_0 = arith.constant 0 : i32
    %c0_i32_1 = arith.constant 0 : i32
    return %c0_i32, %c0_i32_0 : i32, i32
  }
  func.func @transform_10(%arg0: i32) -> (i32, i32) {
    %c0_i32 = arith.constant 0 : i32
    %c0_i32_0 = arith.constant 0 : i32
    %c0_i32_1 = arith.constant 0 : i32
    return %c0_i32, %c0_i32_0 : i32, i32
  }
  func.func @transform_11(%arg0: i32) -> (i32, i32) {
    %c0_i32 = arith.constant 0 : i32
    %c0_i32_0 = arith.constant 0 : i32
    return %arg0, %c0_i32 : i32, i32
  }
}

</mosaic_0001>

<llo_original>
// kernel: tpu_custom_call.1
$region0: #{tpu_custom_call.1}
  #allocation0 [shape = 'u32[]', space=smem, size = 0x4, offset = 0x4, fixed_abs, tag = 'smem constant byte address 0x4 - core index']
  #allocation1 [shape = 'u32[144,128]{1,0:T(1,128)}', space=vmem, size = 0x12000, scoped, tag = 'internal scratch']
  #allocation2 [shape = 'f32[1,1]{1,0:T(1,128)S(6)}', space=smem, size = 0x200, scoped, tag = 'scoped memory for tpu_custom_call.1']
  %s0 = inlined_call_operand.hbm [shape: f32[16,128], index: 0, kind: input, shape index: {}]
  %s1 = inlined_call_operand.hbm [shape: bf16[128,512], index: 1, kind: input, shape index: {}]
  %s2 = inlined_call_operand.vmem [shape: f32[1,512], index: 2, kind: input, shape index: {}]
  %s3 = inlined_call_operand.hbm [shape: bf16[512,512], index: 3, kind: input, shape index: {}]
  %s4 = inlined_call_operand.vmem [shape: f32[1,512], index: 4, kind: input, shape index: {}]
  %s5 = inlined_call_operand.hbm [shape: bf16[512,512], index: 5, kind: input, shape index: {}]
  %s6 = inlined_call_operand.vmem [shape: f32[1,512], index: 6, kind: input, shape index: {}]
  %s7 = inlined_call_operand.hbm [shape: bf16[512,512], index: 7, kind: input, shape index: {}]
  %s8 = inlined_call_operand.vmem [shape: f32[1,512], index: 8, kind: input, shape index: {}]
  %s9 = inlined_call_operand.vmem [shape: bf16[1,512], index: 9, kind: input, shape index: {}]
  %s10 = inlined_call_operand.<no memory space> [shape: f32[1,1], index: 10, kind: input, shape index: {}]
  %s11 = inlined_call_operand.vmem [shape: f32[16,1], index: 11, kind: output, shape index: {}]
  %s12 = sld [smem:[#allocation0]]
  $region74: #{tpu_custom_call.1} parent=0
    _
  %s14 = ssub.s32 1, %s12
  %s15 = scalar_select 0, %s14, %s12
  %16 = sst [smem:[#allocation2]] %s10
  $region1: #{tpu_custom_call.1} parent=0
    #allocation3 [shape = 'u8[8192]{0}', space=vmem, size = 0x2000, scoped, tag = 'input window, operand 0, single buffered']
    #allocation4 [shape = 's32[1]{0}', space=sflag, size = 0x4, scoped, tag = 'scoped memory for tpu_custom_call.1']
    #allocation5 [shape = 'u8[131072]{0}', space=vmem, size = 0x20000, scoped, tag = 'input window, operand 1, single buffered']
    #allocation6 [shape = 's32[1]{0}', space=sflag, size = 0x4, scoped, tag = 'scoped memory for tpu_custom_call.1']
    #allocation7 [shape = 'u8[524288]{0}', space=vmem, size = 0x80000, scoped, tag = 'input window, operand 3, single buffered']
    #allocation8 [shape = 'u8[524288]{0}', space=vmem, size = 0x80000, scoped, tag = 'input window, operand 5, single buffered']
    #allocation9 [shape = 's32[1]{0}', space=sflag, size = 0x4, scoped, tag = 'scoped memory for tpu_custom_call.1']
    #allocation10 [shape = 'u8[524288]{0}', space=vmem, size = 0x80000, scoped, tag = 'input window, operand 7, single buffered']
    %17 = vsyncpa [#allocation4], 0
    %18 = vsyncpa [#allocation6], 0
    %19 = vsyncpa [#allocation9], 0
    // Predicated region
    $region2: #{tpu_custom_call.1} parent=1 // pred_check
      _
    $region3: #{tpu_custom_call.1} parent=1 // pred_check_branch
      %21 = sbr.rel (0) target = $region5
    $region4: #{tpu_custom_call.1} parent=1 // pred_region
      %s23 = ssub.s32 256, 256
      %24 = vsyncadd [#allocation4], %s23
      %s25 = sshll.u32 [#allocation3], 4
      %s26 = int_to_ptr.vmem [resolvable:$true] %s25
      %31 = dma.hbm_to_vmem [thread:$0]  %s0, 256, %s26, [#allocation4], 128, 128, 8
    $region5: #{tpu_custom_call.1} parent=1 // pred_fallthru
      _
    // Predicated region
    $region6: #{tpu_custom_call.1} parent=1 // pred_check
      _
    $region7: #{tpu_custom_call.1} parent=1 // pred_check_branch
      %33 = sbr.rel (0) target = $region9
    $region8: #{tpu_custom_call.1} parent=1 // pred_region
      %s35 = ssub.s32 4096, 4096
      %36 = vsyncadd [#allocation6], %s35
      %s37 = sshll.u32 [#allocation5], 4
      %s38 = int_to_ptr.vmem [resolvable:$true] %s37
      %43 = dma.hbm_to_vmem [thread:$0]  %s1, 4096, %s38, [#allocation6], 256, 256, 16
    $region9: #{tpu_custom_call.1} parent=1 // pred_fallthru
      _
    // Predicated region
    $region10: #{tpu_custom_call.1} parent=1 // pred_check
      _
    $region11: #{tpu_custom_call.1} parent=1 // pred_check_branch
      %45 = sbr.rel (0) target = $region13
    $region12: #{tpu_custom_call.1} parent=1 // pred_region
      _
    $region13: #{tpu_custom_call.1} parent=1 // pred_fallthru
      _
    // Predicated region
    $region14: #{tpu_custom_call.1} parent=1 // pred_check
      _
    $region15: #{tpu_custom_call.1} parent=1 // pred_check_branch
      %47 = sbr.rel (0) target = $region17
    $region16: #{tpu_custom_call.1} parent=1 // pred_region
      %s49 = ssub.s32 16384, 16384
      %50 = vsyncadd [#allocation6], %s49
      %s51 = sshll.u32 [#allocation7], 4
      %s52 = int_to_ptr.vmem [resolvable:$true] %s51
      %57 = dma.hbm_to_vmem [thread:$0]  %s3, 16384, %s52, [#allocation6], 256, 256, 16
    $region17: #{tpu_custom_call.1} parent=1 // pred_fallthru
      _
    // Predicated region
    $region18: #{tpu_custom_call.1} parent=1 // pred_check
      _
    $region19: #{tpu_custom_call.1} parent=1 // pred_check_branch
      %59 = sbr.rel (0) target = $region21
    $region20: #{tpu_custom_call.1} parent=1 // pred_region
      _
    $region21: #{tpu_custom_call.1} parent=1 // pred_fallthru
      _
    // Predicated region
    $region22: #{tpu_custom_call.1} parent=1 // pred_check
      _
    $region23: #{tpu_custom_call.1} parent=1 // pred_check_branch
      %61 = sbr.rel (0) target = $region25
    $region24: #{tpu_custom_call.1} parent=1 // pred_region
      %s63 = ssub.s32 16384, 16384
      %64 = vsyncadd [#allocation9], %s63
      %s65 = sshll.u32 [#allocation8], 4
      %s66 = int_to_ptr.vmem [resolvable:$true] %s65
      %71 = dma.hbm_to_vmem [thread:$0]  %s5, 16384, %s66, [#allocation9], 256, 256, 16
    $region25: #{tpu_custom_call.1} parent=1 // pred_fallthru
      _
    // Predicated region
    $region26: #{tpu_custom_call.1} parent=1 // pred_check
      _
    $region27: #{tpu_custom_call.1} parent=1 // pred_check_branch
      %73 = sbr.rel (0) target = $region29
    $region28: #{tpu_custom_call.1} parent=1 // pred_region
      _
    $region29: #{tpu_custom_call.1} parent=1 // pred_fallthru
      _
    // Predicated region
    $region30: #{tpu_custom_call.1} parent=1 // pred_check
      _
    $region31: #{tpu_custom_call.1} parent=1 // pred_check_branch
      %75 = sbr.rel (0) target = $region33
    $region32: #{tpu_custom_call.1} parent=1 // pred_region
      %s77 = ssub.s32 16384, 16384
      %78 = vsyncadd [#allocation9], %s77
      %s79 = sshll.u32 [#allocation10], 4
      %s80 = int_to_ptr.vmem [resolvable:$true] %s79
      %85 = dma.hbm_to_vmem [thread:$0]  %s7, 16384, %s80, [#allocation9], 256, 256, 16
    $region33: #{tpu_custom_call.1} parent=1 // pred_fallthru
      _
    // Predicated region
    $region34: #{tpu_custom_call.1} parent=1 // pred_check
      _
    $region35: #{tpu_custom_call.1} parent=1 // pred_check_branch
      %87 = sbr.rel (0) target = $region37
    $region36: #{tpu_custom_call.1} parent=1 // pred_region
      _
    $region37: #{tpu_custom_call.1} parent=1 // pred_fallthru
      _
    // Predicated region
    $region38: #{tpu_custom_call.1} parent=1 // pred_check
      _
    $region39: #{tpu_custom_call.1} parent=1 // pred_check_branch
      %89 = sbr.rel (0) target = $region41
    $region40: #{tpu_custom_call.1} parent=1 // pred_region
      _
    $region41: #{tpu_custom_call.1} parent=1 // pred_fallthru
      _
    // Predicated region
    $region42: #{tpu_custom_call.1} parent=1 // pred_check
      _
    $region43: #{tpu_custom_call.1} parent=1 // pred_check_branch
      %91 = sbr.rel (0) target = $region45
    $region44: #{tpu_custom_call.1} parent=1 // pred_region
      _
    $region45: #{tpu_custom_call.1} parent=1 // pred_fallthru
      _
    // Predicated region
    $region46: #{tpu_custom_call.1} parent=1 // pred_check
      _
    $region47: #{tpu_custom_call.1} parent=1 // pred_check_branch
      %93 = sbr.rel (0) target = $region49
    $region48: #{tpu_custom_call.1} parent=1 // pred_region
      %94 = dma.done [#allocation4], 256
    $region49: #{tpu_custom_call.1} parent=1 // pred_fallthru
      _
    // Predicated region
    $region50: #{tpu_custom_call.1} parent=1 // pred_check
      _
    $region51: #{tpu_custom_call.1} parent=1 // pred_check_branch
      %96 = sbr.rel (0) target = $region53
    $region52: #{tpu_custom_call.1} parent=1 // pred_region
      %97 = dma.done [#allocation6], 4096
    $region53: #{tpu_custom_call.1} parent=1 // pred_fallthru
      _
    // Predicated region
    $region54: #{tpu_custom_call.1} parent=1 // pred_check
      _
    $region55: #{tpu_custom_call.1} parent=1 // pred_check_branch
      %99 = sbr.rel (0) target = $region57
    $region56: #{tpu_custom_call.1} parent=1 // pred_region
      %100 = dma.done [#allocation6], 16384
    $region57: #{tpu_custom_call.1} parent=1 // pred_fallthru
      _
    // Predicated region
    $region58: #{tpu_custom_call.1} parent=1 // pred_check
      _
    $region59: #{tpu_custom_call.1} parent=1 // pred_check_branch
      %102 = sbr.rel (0) target = $region61
    $region60: #{tpu_custom_call.1} parent=1 // pred_region
      %103 = dma.done [#allocation9], 16384
    $region61: #{tpu_custom_call.1} parent=1 // pred_fallthru
      _
    // Predicated region
    $region62: #{tpu_custom_call.1} parent=1 // pred_check
      _
    $region63: #{tpu_custom_call.1} parent=1 // pred_check_branch
      %105 = sbr.rel (0) target = $region65
    $region64: #{tpu_custom_call.1} parent=1 // pred_region
      %106 = dma.done [#allocation9], 16384
    $region65: #{tpu_custom_call.1} parent=1 // pred_fallthru
      _
    %v108 = vld [vmem:[#allocation3] sm:$0xff]
    %v109 = vld [vmem:[#allocation3 + $0x8] sm:$0xff]
    %v110 = vpack.c.bf16 %v109, %v108
    %v111 = vld [vmem:[#allocation5] sm:$0xff]
    %v112 = vld [vmem:[#allocation5 + $0x8] sm:$0xff]
    %v113 = vld [vmem:[#allocation5 + $0x10] sm:$0xff]
    %v114 = vld [vmem:[#allocation5 + $0x18] sm:$0xff]
    %v115 = vld [vmem:[#allocation5 + $0x20] sm:$0xff]
    %v116 = vld [vmem:[#allocation5 + $0x28] sm:$0xff]
    %v117 = vld [vmem:[#allocation5 + $0x30] sm:$0xff]
    %v118 = vld [vmem:[#allocation5 + $0x38] sm:$0xff]
    %v119 = vld [vmem:[#allocation5 + $0x40] sm:$0xff]
    %v120 = vld [vmem:[#allocation5 + $0x48] sm:$0xff]
    %v121 = vld [vmem:[#allocation5 + $0x50] sm:$0xff]
    %v122 = vld [vmem:[#allocation5 + $0x58] sm:$0xff]
    %v123 = vld [vmem:[#allocation5 + $0x60] sm:$0xff]
    %v124 = vld [vmem:[#allocation5 + $0x68] sm:$0xff]
    %v125 = vld [vmem:[#allocation5 + $0x70] sm:$0xff]
    %v126 = vld [vmem:[#allocation5 + $0x78] sm:$0xff]
    %v127 = vld [vmem:[#allocation5 + $0x80] sm:$0xff]
    %v128 = vld [vmem:[#allocation5 + $0x88] sm:$0xff]
    %v129 = vld [vmem:[#allocation5 + $0x90] sm:$0xff]
    %v130 = vld [vmem:[#allocation5 + $0x98] sm:$0xff]
    %v131 = vld [vmem:[#allocation5 + $0xa0] sm:$0xff]
    %v132 = vld [vmem:[#allocation5 + $0xa8] sm:$0xff]
    %v133 = vld [vmem:[#allocation5 + $0xb0] sm:$0xff]
    %v134 = vld [vmem:[#allocation5 + $0xb8] sm:$0xff]
    %v135 = vld [vmem:[#allocation5 + $0xc0] sm:$0xff]
    %v136 = vld [vmem:[#allocation5 + $0xc8] sm:$0xff]
    %v137 = vld [vmem:[#allocation5 + $0xd0] sm:$0xff]
    %v138 = vld [vmem:[#allocation5 + $0xd8] sm:$0xff]
    %v139 = vld [vmem:[#allocation5 + $0xe0] sm:$0xff]
    %v140 = vld [vmem:[#allocation5 + $0xe8] sm:$0xff]
    %v141 = vld [vmem:[#allocation5 + $0xf0] sm:$0xff]
    %v142 = vld [vmem:[#allocation5 + $0xf8] sm:$0xff]
    %v143 = vld [vmem:[%s2] sm:$0xf]
    %v145 = vlaneseq
    %v146 = vshrl.u32 %v145, 7
    %v147 = vsub.s32 0, %v146
    %v148 = vrot.slane %v143, %v147
    %v149 = vlaneseq
    %v150 = vshrl.u32 %v149, 7
    %v151 = vsub.s32 1, %v150
    %v152 = vrot.slane %v143, %v151
    %v153 = vlaneseq
    %v154 = vshrl.u32 %v153, 7
    %v155 = vsub.s32 2, %v154
    %v156 = vrot.slane %v143, %v155
    %v157 = vlaneseq
    %v158 = vshrl.u32 %v157, 7
    %v159 = vsub.s32 3, %v158
    %v160 = vrot.slane %v143, %v159
    %v197 = vunpack.c.l.b16 %v111
    %v198 = vunpack.c.h.b16 %v111
    %v199 = vunpack.c.l.b16 %v112
    %v200 = vunpack.c.h.b16 %v112
    %v201 = vunpack.c.l.b16 %v113
    %v202 = vunpack.c.h.b16 %v113
    %v203 = vunpack.c.l.b16 %v114
    %v204 = vunpack.c.h.b16 %v114
    %v205 = vunpack.c.l.b16 %v115
    %v206 = vunpack.c.h.b16 %v115
    %v207 = vunpack.c.l.b16 %v116
    %v208 = vunpack.c.h.b16 %v116
    %v209 = vunpack.c.l.b16 %v117
    %v210 = vunpack.c.h.b16 %v117
    %v211 = vunpack.c.l.b16 %v118
    %v212 = vunpack.c.h.b16 %v118
    %v213 = vunpack.c.l.b16 %v119
    %v214 = vunpack.c.h.b16 %v119
    %v215 = vunpack.c.l.b16 %v120
    %v216 = vunpack.c.h.b16 %v120
    %v217 = vunpack.c.l.b16 %v121
    %v218 = vunpack.c.h.b16 %v121
    %v219 = vunpack.c.l.b16 %v122
    %v220 = vunpack.c.h.b16 %v122
    %v221 = vunpack.c.l.b16 %v123
    %v222 = vunpack.c.h.b16 %v123
    %v223 = vunpack.c.l.b16 %v124
    %v224 = vunpack.c.h.b16 %v124
    %v225 = vunpack.c.l.b16 %v125
    %v226 = vunpack.c.h.b16 %v125
    %v227 = vunpack.c.l.b16 %v126
    %v228 = vunpack.c.h.b16 %v126
    %v229 = vunpack.c.l.b16 %v127
    %v230 = vunpack.c.h.b16 %v127
    %v231 = vunpack.c.l.b16 %v128
    %v232 = vunpack.c.h.b16 %v128
    %v233 = vunpack.c.l.b16 %v129
    %v234 = vunpack.c.h.b16 %v129
    %v235 = vunpack.c.l.b16 %v130
    %v236 = vunpack.c.h.b16 %v130
    %v237 = vunpack.c.l.b16 %v131
    %v238 = vunpack.c.h.b16 %v131
    %v239 = vunpack.c.l.b16 %v132
    %v240 = vunpack.c.h.b16 %v132
    %v241 = vunpack.c.l.b16 %v133
    %v242 = vunpack.c.h.b16 %v133
    %v243 = vunpack.c.l.b16 %v134
    %v244 = vunpack.c.h.b16 %v134
    %v245 = vunpack.c.l.b16 %v135
    %v246 = vunpack.c.h.b16 %v135
    %v247 = vunpack.c.l.b16 %v136
    %v248 = vunpack.c.h.b16 %v136
    %v249 = vunpack.c.l.b16 %v137
    %v250 = vunpack.c.h.b16 %v137
    %v251 = vunpack.c.l.b16 %v138
    %v252 = vunpack.c.h.b16 %v138
    %v253 = vunpack.c.l.b16 %v139
    %v254 = vunpack.c.h.b16 %v139
    %v255 = vunpack.c.l.b16 %v140
    %v256 = vunpack.c.h.b16 %v140
    %v257 = vunpack.c.l.b16 %v141
    %v258 = vunpack.c.h.b16 %v141
    %v259 = vunpack.c.l.b16 %v142
    %v260 = vunpack.c.h.b16 %v142
    %v261 = vpack.c.b16 %v201, %v197
    %v262 = vpack.c.b16 %v202, %v198
    %v263 = vpack.c.b16 %v203, %v199
    %v264 = vpack.c.b16 %v204, %v200
    %v265 = vpack.c.b16 %v209, %v205
    %v266 = vpack.c.b16 %v210, %v206
    %v267 = vpack.c.b16 %v211, %v207
    %v268 = vpack.c.b16 %v212, %v208
    %v269 = vpack.c.b16 %v217, %v213
    %v270 = vpack.c.b16 %v218, %v214
    %v271 = vpack.c.b16 %v219, %v215
    %v272 = vpack.c.b16 %v220, %v216
    %v273 = vpack.c.b16 %v225, %v221
    %v274 = vpack.c.b16 %v226, %v222
    %v275 = vpack.c.b16 %v227, %v223
    %v276 = vpack.c.b16 %v228, %v224
    %v277 = vpack.c.b16 %v233, %v229
    %v278 = vpack.c.b16 %v234, %v230
    %v279 = vpack.c.b16 %v235, %v231
    %v280 = vpack.c.b16 %v236, %v232
    %v281 = vpack.c.b16 %v241, %v237
    %v282 = vpack.c.b16 %v242, %v238
    %v283 = vpack.c.b16 %v243, %v239
    %v284 = vpack.c.b16 %v244, %v240
    %v285 = vpack.c.b16 %v249, %v245
    %v286 = vpack.c.b16 %v250, %v246
    %v287 = vpack.c.b16 %v251, %v247
    %v288 = vpack.c.b16 %v252, %v248
    %v289 = vpack.c.b16 %v257, %v253
    %v290 = vpack.c.b16 %v258, %v254
    %v291 = vpack.c.b16 %v259, %v255
    %v292 = vpack.c.b16 %v260, %v256
    %325 = vmatprep.subr.bf16.mxu0 %v262
    %326 = vmatpush1.bf16.msra.mxu0 %v261
    %327 = vmatprep.subr.bf16.mxu0 %v266
    %328 = vmatpush1.bf16.msra.mxu0 %v265
    %329 = vmatprep.subr.bf16.mxu0 %v270
    %330 = vmatpush1.bf16.msra.mxu0 %v269
    %331 = vmatprep.subr.bf16.mxu0 %v274
    %332 = vmatpush1.bf16.msra.mxu0 %v273
    %333 = vmatprep.subr.bf16.mxu0 %v278
    %334 = vmatpush1.bf16.msra.mxu0 %v277
    %335 = vmatprep.subr.bf16.mxu0 %v282
    %336 = vmatpush1.bf16.msra.mxu0 %v281
    %337 = vmatprep.subr.bf16.mxu0 %v286
    %338 = vmatpush1.bf16.msra.mxu0 %v285
    %339 = vmatprep.subr.bf16.mxu0 %v290
    %340 = vmatpush1.bf16.msra.mxu0 %v289
    %341 = vmatprep.subr.bf16.mxu0 0
    %342 = vmatpush1.bf16.msra.mxu0 0
    %343 = vmatprep.subr.bf16.mxu0 0
    %344 = vmatpush1.bf16.msra.mxu0 0
    %345 = vmatprep.subr.bf16.mxu0 0
    %346 = vmatpush1.bf16.msra.mxu0 0
    %347 = vmatprep.subr.bf16.mxu0 0
    %348 = vmatpush1.bf16.msra.mxu0 0
    %349 = vmatprep.subr.bf16.mxu0 0
    %350 = vmatpush1.bf16.msra.mxu0 0
    %351 = vmatprep.subr.bf16.mxu0 0
    %352 = vmatpush1.bf16.msra.mxu0 0
    %353 = vmatprep.subr.bf16.mxu0 0
    %354 = vmatpush1.bf16.msra.mxu0 0
    %355 = vmatprep.subr.bf16.mxu0 0
    %356 = vmatpush1.bf16.msra.mxu0 0
    %357 = vmatprep.mubr.bf16.mxu0 0
    %358 = vmatmul.mubr.bf16.gmra.mrb[0].mxu0 %v110
    %v359 = vpop.f32.mrb[0].mxu0
    %v360 = vadd.f32 %v148, %v359
    %v361 = vpop.f32.mrb[0].mxu0
    %v362 = vadd.f32 %v152, %v361
    %v363 = vpop.f32.mrb[0].mxu0
    %v364 = vadd.f32 %v148, %v363
    %v365 = vpop.f32.mrb[0].mxu0
    %v366 = vadd.f32 %v152, %v365
    %367 = vdwg.mxu0
    %368 = vmatprep.subr.bf16.mxu0 %v264
    %369 = vmatpush1.bf16.msra.mxu0 %v263
    %370 = vmatprep.subr.bf16.mxu0 %v268
    %371 = vmatpush1.bf16.msra.mxu0 %v267
    %372 = vmatprep.subr.bf16.mxu0 %v272
    %373 = vmatpush1.bf16.msra.mxu0 %v271
    %374 = vmatprep.subr.bf16.mxu0 %v276
    %375 = vmatpush1.bf16.msra.mxu0 %v275
    %376 = vmatprep.subr.bf16.mxu0 %v280
    %377 = vmatpush1.bf16.msra.mxu0 %v279
    %378 = vmatprep.subr.bf16.mxu0 %v284
    %379 = vmatpush1.bf16.msra.mxu0 %v283
    %380 = vmatprep.subr.bf16.mxu0 %v288
    %381 = vmatpush1.bf16.msra.mxu0 %v287
    %382 = vmatprep.subr.bf16.mxu0 %v292
    %383 = vmatpush1.bf16.msra.mxu0 %v291
    %384 = vmatprep.subr.bf16.mxu0 0
    %385 = vmatpush1.bf16.msra.mxu0 0
    %386 = vmatprep.subr.bf16.mxu0 0
    %387 = vmatpush1.bf16.msra.mxu0 0
    %388 = vmatprep.subr.bf16.mxu0 0
    %389 = vmatpush1.bf16.msra.mxu0 0
    %390 = vmatprep.subr.bf16.mxu0 0
    %391 = vmatpush1.bf16.msra.mxu0 0
    %392 = vmatprep.subr.bf16.mxu0 0
    %393 = vmatpush1.bf16.msra.mxu0 0
    %394 = vmatprep.subr.bf16.mxu0 0
    %395 = vmatpush1.bf16.msra.mxu0 0
    %396 = vmatprep.subr.bf16.mxu0 0
    %397 = vmatpush1.bf16.msra.mxu0 0
    %398 = vmatprep.subr.bf16.mxu0 0
    %399 = vmatpush1.bf16.msra.mxu0 0
    %400 = vmatprep.mubr.bf16.mxu0 0
    %401 = vmatmul.mubr.bf16.gmra.mrb[0].mxu0 %v110
    %v402 = vpop.f32.mrb[0].mxu0
    %v403 = vadd.f32 %v156, %v402
    %v404 = vpop.f32.mrb[0].mxu0
    %v405 = vadd.f32 %v160, %v404
    %v406 = vpop.f32.mrb[0].mxu0
    %v407 = vadd.f32 %v156, %v406
    %v408 = vpop.f32.mrb[0].mxu0
    %v409 = vadd.f32 %v160, %v408
    %410 = vdwg.mxu0
    %v411 = vmax.f32 %v360, 0.0
    %v412 = vmax.f32 %v362, 0.0
    %v413 = vmax.f32 %v403, 0.0
    %v414 = vmax.f32 %v405, 0.0
    %v415 = vmax.f32 %v364, 0.0
    %v416 = vmax.f32 %v366, 0.0
    %v417 = vmax.f32 %v407, 0.0
    %v418 = vmax.f32 %v409, 0.0
    %v419 = vpack.c.bf16 %v415, %v411
    %v420 = vpack.c.bf16 %v416, %v412
    %v421 = vpack.c.bf16 %v417, %v413
    %v422 = vpack.c.bf16 %v418, %v414
    %v423 = vld [vmem:[#allocation7] sm:$0xff]
    %v424 = vld [vmem:[#allocation7 + $0x8] sm:$0xff]
    %v425 = vld [vmem:[#allocation7 + $0x10] sm:$0xff]
    %v426 = vld [vmem:[#allocation7 + $0x18] sm:$0xff]
    %v427 = vld [vmem:[#allocation7 + $0x20] sm:$0xff]
    %v428 = vld [vmem:[#allocation7 + $0x28] sm:$0xff]
    %v429 = vld [vmem:[#allocation7 + $0x30] sm:$0xff]
    %v430 = vld [vmem:[#allocation7 + $0x38] sm:$0xff]
    %v431 = vld [vmem:[#allocation7 + $0x40] sm:$0xff]
    %v432 = vld [vmem:[#allocation7 + $0x48] sm:$0xff]
    %v433 = vld [vmem:[#allocation7 + $0x50] sm:$0xff]
    %v434 = vld [vmem:[#allocation7 + $0x58] sm:$0xff]
    %v435 = vld [vmem:[#allocation7 + $0x60] sm:$0xff]
    %v436 = vld [vmem:[#allocation7 + $0x68] sm:$0xff]
    %v437 = vld [vmem:[#allocation7 + $0x70] sm:$0xff]
    %v438 = vld [vmem:[#allocation7 + $0x78] sm:$0xff]
    %v439 = vld [vmem:[#allocation7 + $0x80] sm:$0xff]
    %v440 = vld [vmem:[#allocation7 + $0x88] sm:$0xff]
    %v441 = vld [vmem:[#allocation7 + $0x90] sm:$0xff]
    %v442 = vld [vmem:[#allocation7 + $0x98] sm:$0xff]
    %v443 = vld [vmem:[#allocation7 + $0xa0] sm:$0xff]
    %v444 = vld [vmem:[#allocation7 + $0xa8] sm:$0xff]
    %v445 = vld [vmem:[#allocation7 + $0xb0] sm:$0xff]
    %v446 = vld [vmem:[#allocation7 + $0xb8] sm:$0xff]
    %v447 = vld [vmem:[#allocation7 + $0xc0] sm:$0xff]
    %v448 = vld [vmem:[#allocation7 + $0xc8] sm:$0xff]
    %v449 = vld [vmem:[#allocation7 + $0xd0] sm:$0xff]
    %v450 = vld [vmem:[#allocation7 + $0xd8] sm:$0xff]
    %v451 = vld [vmem:[#allocation7 + $0xe0] sm:$0xff]
    %v452 = vld [vmem:[#allocation7 + $0xe8] sm:$0xff]
    %v453 = vld [vmem:[#allocation7 + $0xf0] sm:$0xff]
    %v454 = vld [vmem:[#allocation7 + $0xf8] sm:$0xff]
    %v455 = vld [vmem:[#allocation7 + $0x100] sm:$0xff]
    %v456 = vld [vmem:[#allocation7 + $0x108] sm:$0xff]
    %v457 = vld [vmem:[#allocation7 + $0x110] sm:$0xff]
    %v458 = vld [vmem:[#allocation7 + $0x118] sm:$0xff]
    %v459 = vld [vmem:[#allocation7 + $0x120] sm:$0xff]
    %v460 = vld [vmem:[#allocation7 + $0x128] sm:$0xff]
    %v461 = vld [vmem:[#allocation7 + $0x130] sm:$0xff]
    %v462 = vld [vmem:[#allocation7 + $0x138] sm:$0xff]
    %v463 = vld [vmem:[#allocation7 + $0x140] sm:$0xff]
    %v464 = vld [vmem:[#allocation7 + $0x148] sm:$0xff]
    %v465 = vld [vmem:[#allocation7 + $0x150] sm:$0xff]
    %v466 = vld [vmem:[#allocation7 + $0x158] sm:$0xff]
    %v467 = vld [vmem:[#allocation7 + $0x160] sm:$0xff]
    %v468 = vld [vmem:[#allocation7 + $0x168] sm:$0xff]
    %v469 = vld [vmem:[#allocation7 + $0x170] sm:$0xff]
    %v470 = vld [vmem:[#allocation7 + $0x178] sm:$0xff]
    %v471 = vld [vmem:[#allocation7 + $0x180] sm:$0xff]
    %v472 = vld [vmem:[#allocation7 + $0x188] sm:$0xff]
    %v473 = vld [vmem:[#allocation7 + $0x190] sm:$0xff]
    %v474 = vld [vmem:[#allocation7 + $0x198] sm:$0xff]
    %v475 = vld [vmem:[#allocation7 + $0x1a0] sm:$0xff]
    %v476 = vld [vmem:[#allocation7 + $0x1a8] sm:$0xff]
    %v477 = vld [vmem:[#allocation7 + $0x1b0] sm:$0xff]
    %v478 = vld [vmem:[#allocation7 + $0x1b8] sm:$0xff]
    %v479 = vld [vmem:[#allocation7 + $0x1c0] sm:$0xff]
    %v480 = vld [vmem:[#allocation7 + $0x1c8] sm:$0xff]
    %v481 = vld [vmem:[#allocation7 + $0x1d0] sm:$0xff]
    %v482 = vld [vmem:[#allocation7 + $0x1d8] sm:$0xff]
    %v483 = vld [vmem:[#allocation7 + $0x1e0] sm:$0xff]
    %v484 = vld [vmem:[#allocation7 + $0x1e8] sm:$0xff]
    %v485 = vld [vmem:[#allocation7 + $0x1f0] sm:$0xff]
    %v486 = vld [vmem:[#allocation7 + $0x1f8] sm:$0xff]
    %v487 = vld [vmem:[#allocation7 + $0x200] sm:$0xff]
    %v488 = vld [vmem:[#allocation7 + $0x208] sm:$0xff]
    %v489 = vld [vmem:[#allocation7 + $0x210] sm:$0xff]
    %v490 = vld [vmem:[#allocation7 + $0x218] sm:$0xff]
    %v491 = vld [vmem:[#allocation7 + $0x220] sm:$0xff]
    %v492 = vld [vmem:[#allocation7 + $0x228] sm:$0xff]
    %v493 = vld [vmem:[#allocation7 + $0x230] sm:$0xff]
    %v494 = vld [vmem:[#allocation7 + $0x238] sm:$0xff]
    %v495 = vld [vmem:[#allocation7 + $0x240] sm:$0xff]
    %v496 = vld [vmem:[#allocation7 + $0x248] sm:$0xff]
    %v497 = vld [vmem:[#allocation7 + $0x250] sm:$0xff]
    %v498 = vld [vmem:[#allocation7 + $0x258] sm:$0xff]
    %v499 = vld [vmem:[#allocation7 + $0x260] sm:$0xff]
    %v500 = vld [vmem:[#allocation7 + $0x268] sm:$0xff]
    %v501 = vld [vmem:[#allocation7 + $0x270] sm:$0xff]
    %v502 = vld [vmem:[#allocation7 + $0x278] sm:$0xff]
    %v503 = vld [vmem:[#allocation7 + $0x280] sm:$0xff]
    %v504 = vld [vmem:[#allocation7 + $0x288] sm:$0xff]
    %v505 = vld [vmem:[#allocation7 + $0x290] sm:$0xff]
    %v506 = vld [vmem:[#allocation7 + $0x298] sm:$0xff]
    %v507 = vld [vmem:[#allocation7 + $0x2a0] sm:$0xff]
    %v508 = vld [vmem:[#allocation7 + $0x2a8] sm:$0xff]
    %v509 = vld [vmem:[#allocation7 + $0x2b0] sm:$0xff]
    %v510 = vld [vmem:[#allocation7 + $0x2b8] sm:$0xff]
    %v511 = vld [vmem:[#allocation7 + $0x2c0] sm:$0xff]
    %v512 = vld [vmem:[#allocation7 + $0x2c8] sm:$0xff]
    %v513 = vld [vmem:[#allocation7 + $0x2d0] sm:$0xff]
    %v514 = vld [vmem:[#allocation7 + $0x2d8] sm:$0xff]
    %v515 = vld [vmem:[#allocation7 + $0x2e0] sm:$0xff]
    %v516 = vld [vmem:[#allocation7 + $0x2e8] sm:$0xff]
    %v517 = vld [vmem:[#allocation7 + $0x2f0] sm:$0xff]
    %v518 = vld [vmem:[#allocation7 + $0x2f8] sm:$0xff]
    %v519 = vld [vmem:[#allocation7 + $0x300] sm:$0xff]
    %v520 = vld [vmem:[#allocation7 + $0x308] sm:$0xff]
    %v521 = vld [vmem:[#allocation7 + $0x310] sm:$0xff]
    %v522 = vld [vmem:[#allocation7 + $0x318] sm:$0xff]
    %v523 = vld [vmem:[#allocation7 + $0x320] sm:$0xff]
    %v524 = vld [vmem:[#allocation7 + $0x328] sm:$0xff]
    %v525 = vld [vmem:[#allocation7 + $0x330] sm:$0xff]
    %v526 = vld [vmem:[#allocation7 + $0x338] sm:$0xff]
    %v527 = vld [vmem:[#allocation7 + $0x340] sm:$0xff]
    %v528 = vld [vmem:[#allocation7 + $0x348] sm:$0xff]
    %v529 = vld [vmem:[#allocation7 + $0x350] sm:$0xff]
    %v530 = vld [vmem:[#allocation7 + $0x358] sm:$0xff]
    %v531 = vld [vmem:[#allocation7 + $0x360] sm:$0xff]
    %v532 = vld [vmem:[#allocation7 + $0x368] sm:$0xff]
    %v533 = vld [vmem:[#allocation7 + $0x370] sm:$0xff]
    %v534 = vld [vmem:[#allocation7 + $0x378] sm:$0xff]
    %v535 = vld [vmem:[#allocation7 + $0x380] sm:$0xff]
    %v536 = vld [vmem:[#allocation7 + $0x388] sm:$0xff]
    %v537 = vld [vmem:[#allocation7 + $0x390] sm:$0xff]
    %v538 = vld [vmem:[#allocation7 + $0x398] sm:$0xff]
    %v539 = vld [vmem:[#allocation7 + $0x3a0] sm:$0xff]
    %v540 = vld [vmem:[#allocation7 + $0x3a8] sm:$0xff]
    %v541 = vld [vmem:[#allocation7 + $0x3b0] sm:$0xff]
    %v542 = vld [vmem:[#allocation7 + $0x3b8] sm:$0xff]
    %v543 = vld [vmem:[#allocation7 + $0x3c0] sm:$0xff]
    %v544 = vld [vmem:[#allocation7 + $0x3c8] sm:$0xff]
    %v545 = vld [vmem:[#allocation7 + $0x3d0] sm:$0xff]
    %v546 = vld [vmem:[#allocation7 + $0x3d8] sm:$0xff]
    %v547 = vld [vmem:[#allocation7 + $0x3e0] sm:$0xff]
    %v548 = vld [vmem:[#allocation7 + $0x3e8] sm:$0xff]
    %v549 = vld [vmem:[#allocation7 + $0x3f0] sm:$0xff]
    %v550 = vld [vmem:[#allocation7 + $0x3f8] sm:$0xff]
    %v551 = vld [vmem:[%s4] sm:$0xf]
    %v553 = vlaneseq
    %v554 = vshrl.u32 %v553, 7
    %v555 = vsub.s32 0, %v554
    %v556 = vrot.slane %v551, %v555
    %v557 = vlaneseq
    %v558 = vshrl.u32 %v557, 7
    %v559 = vsub.s32 1, %v558
    %v560 = vrot.slane %v551, %v559
    %v561 = vlaneseq
    %v562 = vshrl.u32 %v561, 7
    %v563 = vsub.s32 2, %v562
    %v564 = vrot.slane %v551, %v563
    %v565 = vlaneseq
    %v566 = vshrl.u32 %v565, 7
    %v567 = vsub.s32 3, %v566
    %v568 = vrot.slane %v551, %v567
    %v701 = vunpack.c.l.b16 %v423
    %v702 = vunpack.c.h.b16 %v423
    %v703 = vunpack.c.l.b16 %v424
    %v704 = vunpack.c.h.b16 %v424
    %v705 = vunpack.c.l.b16 %v425
    %v706 = vunpack.c.h.b16 %v425
    %v707 = vunpack.c.l.b16 %v426
    %v708 = vunpack.c.h.b16 %v426
    %v709 = vunpack.c.l.b16 %v427
    %v710 = vunpack.c.h.b16 %v427
    %v711 = vunpack.c.l.b16 %v428
    %v712 = vunpack.c.h.b16 %v428
    %v713 = vunpack.c.l.b16 %v429
    %v714 = vunpack.c.h.b16 %v429
    %v715 = vunpack.c.l.b16 %v430
    %v716 = vunpack.c.h.b16 %v430
    %v717 = vunpack.c.l.b16 %v431
    %v718 = vunpack.c.h.b16 %v431
    %v719 = vunpack.c.l.b16 %v432
    %v720 = vunpack.c.h.b16 %v432
    %v721 = vunpack.c.l.b16 %v433
    %v722 = vunpack.c.h.b16 %v433
    %v723 = vunpack.c.l.b16 %v434
    %v724 = vunpack.c.h.b16 %v434
    %v725 = vunpack.c.l.b16 %v435
    %v726 = vunpack.c.h.b16 %v435
    %v727 = vunpack.c.l.b16 %v436
    %v728 = vunpack.c.h.b16 %v436
    %v729 = vunpack.c.l.b16 %v437
    %v730 = vunpack.c.h.b16 %v437
    %v731 = vunpack.c.l.b16 %v438
    %v732 = vunpack.c.h.b16 %v438
    %v733 = vunpack.c.l.b16 %v439
    %v734 = vunpack.c.h.b16 %v439
    %v735 = vunpack.c.l.b16 %v440
    %v736 = vunpack.c.h.b16 %v440
    %v737 = vunpack.c.l.b16 %v441
    %v738 = vunpack.c.h.b16 %v441
    %v739 = vunpack.c.l.b16 %v442
    %v740 = vunpack.c.h.b16 %v442
    %v741 = vunpack.c.l.b16 %v443
    %v742 = vunpack.c.h.b16 %v443
    %v743 = vunpack.c.l.b16 %v444
    %v744 = vunpack.c.h.b16 %v444
    %v745 = vunpack.c.l.b16 %v445
    %v746 = vunpack.c.h.b16 %v445
    %v747 = vunpack.c.l.b16 %v446
    %v748 = vunpack.c.h.b16 %v446
    %v749 = vunpack.c.l.b16 %v447
    %v750 = vunpack.c.h.b16 %v447
    %v751 = vunpack.c.l.b16 %v448
    %v752 = vunpack.c.h.b16 %v448
    %v753 = vunpack.c.l.b16 %v449
    %v754 = vunpack.c.h.b16 %v449
    %v755 = vunpack.c.l.b16 %v450
    %v756 = vunpack.c.h.b16 %v450
    %v757 = vunpack.c.l.b16 %v451
    %v758 = vunpack.c.h.b16 %v451
    %v759 = vunpack.c.l.b16 %v452
    %v760 = vunpack.c.h.b16 %v452
    %v761 = vunpack.c.l.b16 %v453
    %v762 = vunpack.c.h.b16 %v453
    %v763 = vunpack.c.l.b16 %v454
    %v764 = vunpack.c.h.b16 %v454
    %v765 = vunpack.c.l.b16 %v455
    %v766 = vunpack.c.h.b16 %v455
    %v767 = vunpack.c.l.b16 %v456
    %v768 = vunpack.c.h.b16 %v456
    %v769 = vunpack.c.l.b16 %v457
    %v770 = vunpack.c.h.b16 %v457
    %v771 = vunpack.c.l.b16 %v458
    %v772 = vunpack.c.h.b16 %v458
    %v773 = vunpack.c.l.b16 %v459
    %v774 = vunpack.c.h.b16 %v459
    %v775 = vunpack.c.l.b16 %v460
    %v776 = vunpack.c.h.b16 %v460
    %v777 = vunpack.c.l.b16 %v461
    %v778 = vunpack.c.h.b16 %v461
    %v779 = vunpack.c.l.b16 %v462
    %v780 = vunpack.c.h.b16 %v462
    %v781 = vunpack.c.l.b16 %v463
    %v782 = vunpack.c.h.b16 %v463
    %v783 = vunpack.c.l.b16 %v464
    %v784 = vunpack.c.h.b16 %v464
    %v785 = vunpack.c.l.b16 %v465
    %v786 = vunpack.c.h.b16 %v465
    %v787 = vunpack.c.l.b16 %v466
    %v788 = vunpack.c.h.b16 %v466
    %v789 = vunpack.c.l.b16 %v467
    %v790 = vunpack.c.h.b16 %v467
    %v791 = vunpack.c.l.b16 %v468
    %v792 = vunpack.c.h.b16 %v468
    %v793 = vunpack.c.l.b16 %v469
    %v794 = vunpack.c.h.b16 %v469
    %v795 = vunpack.c.l.b16 %v470
    %v796 = vunpack.c.h.b16 %v470
    %v797 = vunpack.c.l.b16 %v471
    %v798 = vunpack.c.h.b16 %v471
    %v799 = vunpack.c.l.b16 %v472
    %v800 = vunpack.c.h.b16 %v472
    %v801 = vunpack.c.l.b16 %v473
    %v802 = vunpack.c.h.b16 %v473
    %v803 = vunpack.c.l.b16 %v474
    %v804 = vunpack.c.h.b16 %v474
    %v805 = vunpack.c.l.b16 %v475
    %v806 = vunpack.c.h.b16 %v475
    %v807 = vunpack.c.l.b16 %v476
    %v808 = vunpack.c.h.b16 %v476
    %v809 = vunpack.c.l.b16 %v477
    %v810 = vunpack.c.h.b16 %v477
    %v811 = vunpack.c.l.b16 %v478
    %v812 = vunpack.c.h.b16 %v478
    %v813 = vunpack.c.l.b16 %v479
    %v814 = vunpack.c.h.b16 %v479
    %v815 = vunpack.c.l.b16 %v480
    %v816 = vunpack.c.h.b16 %v480
    %v817 = vunpack.c.l.b16 %v481
    %v818 = vunpack.c.h.b16 %v481
    %v819 = vunpack.c.l.b16 %v482
    %v820 = vunpack.c.h.b16 %v482
    %v821 = vunpack.c.l.b16 %v483
    %v822 = vunpack.c.h.b16 %v483
    %v823 = vunpack.c.l.b16 %v484
    %v824 = vunpack.c.h.b16 %v484
    %v825 = vunpack.c.l.b16 %v485
    %v826 = vunpack.c.h.b16 %v485
    %v827 = vunpack.c.l.b16 %v486
    %v828 = vunpack.c.h.b16 %v486
    %v829 = vunpack.c.l.b16 %v487
    %v830 = vunpack.c.h.b16 %v487
    %v831 = vunpack.c.l.b16 %v488
    %v832 = vunpack.c.h.b16 %v488
    %v833 = vunpack.c.l.b16 %v489
    %v834 = vunpack.c.h.b16 %v489
    %v835 = vunpack.c.l.b16 %v490
    %v836 = vunpack.c.h.b16 %v490
    %v837 = vunpack.c.l.b16 %v491
    %v838 = vunpack.c.h.b16 %v491
    %v839 = vunpack.c.l.b16 %v492
    %v840 = vunpack.c.h.b16 %v492
    %v841 = vunpack.c.l.b16 %v493
    %v842 = vunpack.c.h.b16 %v493
    %v843 = vunpack.c.l.b16 %v494
    %v844 = vunpack.c.h.b16 %v494
    %v845 = vunpack.c.l.b16 %v495
    %v846 = vunpack.c.h.b16 %v495
    %v847 = vunpack.c.l.b16 %v496
    %v848 = vunpack.c.h.b16 %v496
    %v849 = vunpack.c.l.b16 %v497
    %v850 = vunpack.c.h.b16 %v497
    %v851 = vunpack.c.l.b16 %v498
    %v852 = vunpack.c.h.b16 %v498
    %v853 = vunpack.c.l.b16 %v499
    %v854 = vunpack.c.h.b16 %v499
    %v855 = vunpack.c.l.b16 %v500
    %v856 = vunpack.c.h.b16 %v500
    %v857 = vunpack.c.l.b16 %v501
    %v858 = vunpack.c.h.b16 %v501
    %v859 = vunpack.c.l.b16 %v502
    %v860 = vunpack.c.h.b16 %v502
    %v861 = vunpack.c.l.b16 %v503
    %v862 = vunpack.c.h.b16 %v503
    %v863 = vunpack.c.l.b16 %v504
    %v864 = vunpack.c.h.b16 %v504
    %v865 = vunpack.c.l.b16 %v505
    %v866 = vunpack.c.h.b16 %v505
    %v867 = vunpack.c.l.b16 %v506
    %v868 = vunpack.c.h.b16 %v506
    %v869 = vunpack.c.l.b16 %v507
    %v870 = vunpack.c.h.b16 %v507
    %v871 = vunpack.c.l.b16 %v508
    %v872 = vunpack.c.h.b16 %v508
    %v873 = vunpack.c.l.b16 %v509
    %v874 = vunpack.c.h.b16 %v509
    %v875 = vunpack.c.l.b16 %v510
    %v876 = vunpack.c.h.b16 %v510
    %v877 = vunpack.c.l.b16 %v511
    %v878 = vunpack.c.h.b16 %v511
    %v879 = vunpack.c.l.b16 %v512
    %v880 = vunpack.c.h.b16 %v512
    %v881 = vunpack.c.l.b16 %v513
    %v882 = vunpack.c.h.b16 %v513
    %v883 = vunpack.c.l.b16 %v514
    %v884 = vunpack.c.h.b16 %v514
    %v885 = vunpack.c.l.b16 %v515
    %v886 = vunpack.c.h.b16 %v515
    %v887 = vunpack.c.l.b16 %v516
    %v888 = vunpack.c.h.b16 %v516
    %v889 = vunpack.c.l.b16 %v517
    %v890 = vunpack.c.h.b16 %v517
    %v891 = vunpack.c.l.b16 %v518
    %v892 = vunpack.c.h.b16 %v518
    %v893 = vunpack.c.l.b16 %v519
    %v894 = vunpack.c.h.b16 %v519
    %v895 = vunpack.c.l.b16 %v520
    %v896 = vunpack.c.h.b16 %v520
    %v897 = vunpack.c.l.b16 %v521
    %v898 = vunpack.c.h.b16 %v521
    %v899 = vunpack.c.l.b16 %v522
    %v900 = vunpack.c.h.b16 %v522
    %v901 = vunpack.c.l.b16 %v523
    %v902 = vunpack.c.h.b16 %v523
    %v903 = vunpack.c.l.b16 %v524
    %v904 = vunpack.c.h.b16 %v524
    %v905 = vunpack.c.l.b16 %v525
    %v906 = vunpack.c.h.b16 %v525
    %v907 = vunpack.c.l.b16 %v526
    %v908 = vunpack.c.h.b16 %v526
    %v909 = vunpack.c.l.b16 %v527
    %v910 = vunpack.c.h.b16 %v527
    %v911 = vunpack.c.l.b16 %v528
    %v912 = vunpack.c.h.b16 %v528
    %v913 = vunpack.c.l.b16 %v529
    %v914 = vunpack.c.h.b16 %v529
    %v915 = vunpack.c.l.b16 %v530
    %v916 = vunpack.c.h.b16 %v530
    %v917 = vunpack.c.l.b16 %v531
    %v918 = vunpack.c.h.b16 %v531
    %v919 = vunpack.c.l.b16 %v532
    %v920 = vunpack.c.h.b16 %v532
    %v921 = vunpack.c.l.b16 %v533
    %v922 = vunpack.c.h.b16 %v533
    %v923 = vunpack.c.l.b16 %v534
    %v924 = vunpack.c.h.b16 %v534
    %v925 = vunpack.c.l.b16 %v535
    %v926 = vunpack.c.h.b16 %v535
    %v927 = vunpack.c.l.b16 %v536
    %v928 = vunpack.c.h.b16 %v536
    %v929 = vunpack.c.l.b16 %v537
    %v930 = vunpack.c.h.b16 %v537
    %v931 = vunpack.c.l.b16 %v538
    %v932 = vunpack.c.h.b16 %v538
    %v933 = vunpack.c.l.b16 %v539
    %v934 = vunpack.c.h.b16 %v539
    %v935 = vunpack.c.l.b16 %v540
    %v936 = vunpack.c.h.b16 %v540
    %v937 = vunpack.c.l.b16 %v541
    %v938 = vunpack.c.h.b16 %v541
    %v939 = vunpack.c.l.b16 %v542
    %v940 = vunpack.c.h.b16 %v542
    %v941 = vunpack.c.l.b16 %v543
    %v942 = vunpack.c.h.b16 %v543
    %v943 = vunpack.c.l.b16 %v544
    %v944 = vunpack.c.h.b16 %v544
    %v945 = vunpack.c.l.b16 %v545
    %v946 = vunpack.c.h.b16 %v545
    %v947 = vunpack.c.l.b16 %v546
    %v948 = vunpack.c.h.b16 %v546
    %v949 = vunpack.c.l.b16 %v547
    %v950 = vunpack.c.h.b16 %v547
    %v951 = vunpack.c.l.b16 %v548
    %v952 = vunpack.c.h.b16 %v548
    %v953 = vunpack.c.l.b16 %v549
    %v954 = vunpack.c.h.b16 %v549
    %v955 = vunpack.c.l.b16 %v550
    %v956 = vunpack.c.h.b16 %v550
    %v957 = vpack.c.b16 %v705, %v701
    %v958 = vpack.c.b16 %v706, %v702
    %v959 = vpack.c.b16 %v707, %v703
    %v960 = vpack.c.b16 %v708, %v704
    %v961 = vpack.c.b16 %v713, %v709
    %v962 = vpack.c.b16 %v714, %v710
    %v963 = vpack.c.b16 %v715, %v711
    %v964 = vpack.c.b16 %v716, %v712
    %v965 = vpack.c.b16 %v721, %v717
    %v966 = vpack.c.b16 %v722, %v718
    %v967 = vpack.c.b16 %v723, %v719
    %v968 = vpack.c.b16 %v724, %v720
    %v969 = vpack.c.b16 %v729, %v725
    %v970 = vpack.c.b16 %v730, %v726
    %v971 = vpack.c.b16 %v731, %v727
    %v972 = vpack.c.b16 %v732, %v728
    %v973 = vpack.c.b16 %v737, %v733
    %v974 = vpack.c.b16 %v738, %v734
    %v975 = vpack.c.b16 %v739, %v735
    %v976 = vpack.c.b16 %v740, %v736
    %v977 = vpack.c.b16 %v745, %v741
    %v978 = vpack.c.b16 %v746, %v742
    %v979 = vpack.c.b16 %v747, %v743
    %v980 = vpack.c.b16 %v748, %v744
    %v981 = vpack.c.b16 %v753, %v749
    %v982 = vpack.c.b16 %v754, %v750
    %v983 = vpack.c.b16 %v755, %v751
    %v984 = vpack.c.b16 %v756, %v752
    %v985 = vpack.c.b16 %v761, %v757
    %v986 = vpack.c.b16 %v762, %v758
    %v987 = vpack.c.b16 %v763, %v759
    %v988 = vpack.c.b16 %v764, %v760
    %v989 = vpack.c.b16 %v769, %v765
    %v990 = vpack.c.b16 %v770, %v766
    %v991 = vpack.c.b16 %v771, %v767
    %v992 = vpack.c.b16 %v772, %v768
    %v993 = vpack.c.b16 %v777, %v773
    %v994 = vpack.c.b16 %v778, %v774
    %v995 = vpack.c.b16 %v779, %v775
    %v996 = vpack.c.b16 %v780, %v776
    %v997 = vpack.c.b16 %v785, %v781
    %v998 = vpack.c.b16 %v786, %v782
    %v999 = vpack.c.b16 %v787, %v783
    %v1000 = vpack.c.b16 %v788, %v784
    %v1001 = vpack.c.b16 %v793, %v789
    %v1002 = vpack.c.b16 %v794, %v790
    %v1003 = vpack.c.b16 %v795, %v791
    %v1004 = vpack.c.b16 %v796, %v792
    %v1005 = vpack.c.b16 %v801, %v797
    %v1006 = vpack.c.b16 %v802, %v798
    %v1007 = vpack.c.b16 %v803, %v799
    %v1008 = vpack.c.b16 %v804, %v800
    %v1009 = vpack.c.b16 %v809, %v805
    %v1010 = vpack.c.b16 %v810, %v806
    %v1011 = vpack.c.b16 %v811, %v807
    %v1012 = vpack.c.b16 %v812, %v808
    %v1013 = vpack.c.b16 %v817, %v813
    %v1014 = vpack.c.b16 %v818, %v814
    %v1015 = vpack.c.b16 %v819, %v815
    %v1016 = vpack.c.b16 %v820, %v816
    %v1017 = vpack.c.b16 %v825, %v821
    %v1018 = vpack.c.b16 %v826, %v822
    %v1019 = vpack.c.b16 %v827, %v823
    %v1020 = vpack.c.b16 %v828, %v824
    %v1021 = vpack.c.b16 %v833, %v829
    %v1022 = vpack.c.b16 %v834, %v830
    %v1023 = vpack.c.b16 %v835, %v831
    %v1024 = vpack.c.b16 %v836, %v832
    %v1025 = vpack.c.b16 %v841, %v837
    %v1026 = vpack.c.b16 %v842, %v838
    %v1027 = vpack.c.b16 %v843, %v839
    %v1028 = vpack.c.b16 %v844, %v840
    %v1029 = vpack.c.b16 %v849, %v845
    %v1030 = vpack.c.b16 %v850, %v846
    %v1031 = vpack.c.b16 %v851, %v847
    %v1032 = vpack.c.b16 %v852, %v848
    %v1033 = vpack.c.b16 %v857, %v853
    %v1034 = vpack.c.b16 %v858, %v854
    %v1035 = vpack.c.b16 %v859, %v855
    %v1036 = vpack.c.b16 %v860, %v856
    %v1037 = vpack.c.b16 %v865, %v861
    %v1038 = vpack.c.b16 %v866, %v862
    %v1039 = vpack.c.b16 %v867, %v863
    %v1040 = vpack.c.b16 %v868, %v864
    %v1041 = vpack.c.b16 %v873, %v869
    %v1042 = vpack.c.b16 %v874, %v870
    %v1043 = vpack.c.b16 %v875, %v871
    %v1044 = vpack.c.b16 %v876, %v872
    %v1045 = vpack.c.b16 %v881, %v877
    %v1046 = vpack.c.b16 %v882, %v878
    %v1047 = vpack.c.b16 %v883, %v879
    %v1048 = vpack.c.b16 %v884, %v880
    %v1049 = vpack.c.b16 %v889, %v885
    %v1050 = vpack.c.b16 %v890, %v886
    %v1051 = vpack.c.b16 %v891, %v887
    %v1052 = vpack.c.b16 %v892, %v888
    %v1053 = vpack.c.b16 %v897, %v893
    %v1054 = vpack.c.b16 %v898, %v894
    %v1055 = vpack.c.b16 %v899, %v895
    %v1056 = vpack.c.b16 %v900, %v896
    %v1057 = vpack.c.b16 %v905, %v901
    %v1058 = vpack.c.b16 %v906, %v902
    %v1059 = vpack.c.b16 %v907, %v903
    %v1060 = vpack.c.b16 %v908, %v904
    %v1061 = vpack.c.b16 %v913, %v909
    %v1062 = vpack.c.b16 %v914, %v910
    %v1063 = vpack.c.b16 %v915, %v911
    %v1064 = vpack.c.b16 %v916, %v912
    %v1065 = vpack.c.b16 %v921, %v917
    %v1066 = vpack.c.b16 %v922, %v918
    %v1067 = vpack.c.b16 %v923, %v919
    %v1068 = vpack.c.b16 %v924, %v920
    %v1069 = vpack.c.b16 %v929, %v925
    %v1070 = vpack.c.b16 %v930, %v926
    %v1071 = vpack.c.b16 %v931, %v927
    %v1072 = vpack.c.b16 %v932, %v928
    %v1073 = vpack.c.b16 %v937, %v933
    %v1074 = vpack.c.b16 %v938, %v934
    %v1075 = vpack.c.b16 %v939, %v935
    %v1076 = vpack.c.b16 %v940, %v936
    %v1077 = vpack.c.b16 %v945, %v941
    %v1078 = vpack.c.b16 %v946, %v942
    %v1079 = vpack.c.b16 %v947, %v943
    %v1080 = vpack.c.b16 %v948, %v944
    %v1081 = vpack.c.b16 %v953, %v949
    %v1082 = vpack.c.b16 %v954, %v950
    %v1083 = vpack.c.b16 %v955, %v951
    %v1084 = vpack.c.b16 %v956, %v952
    %1213 = vmatprep.subr.bf16.mxu0 %v958
    %1214 = vmatpush1.bf16.msra.mxu0 %v957
    %1215 = vmatprep.subr.bf16.mxu0 %v962
    %1216 = vmatpush1.bf16.msra.mxu0 %v961
    %1217 = vmatprep.subr.bf16.mxu0 %v966
    %1218 = vmatpush1.bf16.msra.mxu0 %v965
    %1219 = vmatprep.subr.bf16.mxu0 %v970
    %1220 = vmatpush1.bf16.msra.mxu0 %v969
    %1221 = vmatprep.subr.bf16.mxu0 %v974
    %1222 = vmatpush1.bf16.msra.mxu0 %v973
    %1223 = vmatprep.subr.bf16.mxu0 %v978
    %1224 = vmatpush1.bf16.msra.mxu0 %v977
    %1225 = vmatprep.subr.bf16.mxu0 %v982
    %1226 = vmatpush1.bf16.msra.mxu0 %v981
    %1227 = vmatprep.subr.bf16.mxu0 %v986
    %1228 = vmatpush1.bf16.msra.mxu0 %v985
    %1229 = vmatprep.subr.bf16.mxu0 %v990
    %1230 = vmatpush1.bf16.msra.mxu0 %v989
    %1231 = vmatprep.subr.bf16.mxu0 %v994
    %1232 = vmatpush1.bf16.msra.mxu0 %v993
    %1233 = vmatprep.subr.bf16.mxu0 %v998
    %1234 = vmatpush1.bf16.msra.mxu0 %v997
    %1235 = vmatprep.subr.bf16.mxu0 %v1002
    %1236 = vmatpush1.bf16.msra.mxu0 %v1001
    %1237 = vmatprep.subr.bf16.mxu0 %v1006
    %1238 = vmatpush1.bf16.msra.mxu0 %v1005
    %1239 = vmatprep.subr.bf16.mxu0 %v1010
    %1240 = vmatpush1.bf16.msra.mxu0 %v1009
    %1241 = vmatprep.subr.bf16.mxu0 %v1014
    %1242 = vmatpush1.bf16.msra.mxu0 %v1013
    %1243 = vmatprep.subr.bf16.mxu0 %v1018
    %1244 = vmatpush1.bf16.msra.mxu0 %v1017
    %1245 = vmatprep.mubr.bf16.mxu0 %v420
    %1246 = vmatmul.mubr.bf16.gmra.mrb[0].mxu0 %v419
    %v1247 = vpop.f32.mrb[0].mxu0
    %v1248 = vadd.f32 %v556, %v1247
    %v1249 = vpop.f32.mrb[0].mxu0
    %v1250 = vadd.f32 %v560, %v1249
    %v1251 = vpop.f32.mrb[0].mxu0
    %v1252 = vadd.f32 %v556, %v1251
    %v1253 = vpop.f32.mrb[0].mxu0
    %v1254 = vadd.f32 %v560, %v1253
    %1255 = vdwg.mxu0
    %1256 = vmatprep.subr.bf16.mxu0 %v1022
    %1257 = vmatpush1.bf16.msra.mxu0 %v1021
    %1258 = vmatprep.subr.bf16.mxu0 %v1026
    %1259 = vmatpush1.bf16.msra.mxu0 %v1025
    %1260 = vmatprep.subr.bf16.mxu0 %v1030
    %1261 = vmatpush1.bf16.msra.mxu0 %v1029
    %1262 = vmatprep.subr.bf16.mxu0 %v1034
    %1263 = vmatpush1.bf16.msra.mxu0 %v1033
    %1264 = vmatprep.subr.bf16.mxu0 %v1038
    %1265 = vmatpush1.bf16.msra.mxu0 %v1037
    %1266 = vmatprep.subr.bf16.mxu0 %v1042
    %1267 = vmatpush1.bf16.msra.mxu0 %v1041
    %1268 = vmatprep.subr.bf16.mxu0 %v1046
    %1269 = vmatpush1.bf16.msra.mxu0 %v1045
    %1270 = vmatprep.subr.bf16.mxu0 %v1050
    %1271 = vmatpush1.bf16.msra.mxu0 %v1049
    %1272 = vmatprep.subr.bf16.mxu0 %v1054
    %1273 = vmatpush1.bf16.msra.mxu0 %v1053
    %1274 = vmatprep.subr.bf16.mxu0 %v1058
    %1275 = vmatpush1.bf16.msra.mxu0 %v1057
    %1276 = vmatprep.subr.bf16.mxu0 %v1062
    %1277 = vmatpush1.bf16.msra.mxu0 %v1061
    %1278 = vmatprep.subr.bf16.mxu0 %v1066
    %1279 = vmatpush1.bf16.msra.mxu0 %v1065
    %1280 = vmatprep.subr.bf16.mxu0 %v1070
    %1281 = vmatpush1.bf16.msra.mxu0 %v1069
    %1282 = vmatprep.subr.bf16.mxu0 %v1074
    %1283 = vmatpush1.bf16.msra.mxu0 %v1073
    %1284 = vmatprep.subr.bf16.mxu0 %v1078
    %1285 = vmatpush1.bf16.msra.mxu0 %v1077
    %1286 = vmatprep.subr.bf16.mxu0 %v1082
    %1287 = vmatpush1.bf16.msra.mxu0 %v1081
    %1288 = vmatprep.mubr.bf16.mxu0 %v422
    %1289 = vmatmul.mubr.bf16.gmra.mrb[0].mxu0 %v421
    %v1290 = vpop.f32.mrb[0].mxu0
    %v1291 = vadd.f32 %v1248, %v1290
    %v1292 = vpop.f32.mrb[0].mxu0
    %v1293 = vadd.f32 %v1250, %v1292
    %v1294 = vpop.f32.mrb[0].mxu0
    %v1295 = vadd.f32 %v1252, %v1294
    %v1296 = vpop.f32.mrb[0].mxu0
    %v1297 = vadd.f32 %v1254, %v1296
    %1298 = vdwg.mxu0
    %1299 = vmatprep.subr.bf16.mxu0 %v960
    %1300 = vmatpush1.bf16.msra.mxu0 %v959
    %1301 = vmatprep.subr.bf16.mxu0 %v964
    %1302 = vmatpush1.bf16.msra.mxu0 %v963
    %1303 = vmatprep.subr.bf16.mxu0 %v968
    %1304 = vmatpush1.bf16.msra.mxu0 %v967
    %1305 = vmatprep.subr.bf16.mxu0 %v972
    %1306 = vmatpush1.bf16.msra.mxu0 %v971
    %1307 = vmatprep.subr.bf16.mxu0 %v976
    %1308 = vmatpush1.bf16.msra.mxu0 %v975
    %1309 = vmatprep.subr.bf16.mxu0 %v980
    %1310 = vmatpush1.bf16.msra.mxu0 %v979
    %1311 = vmatprep.subr.bf16.mxu0 %v984
    %1312 = vmatpush1.bf16.msra.mxu0 %v983
    %1313 = vmatprep.subr.bf16.mxu0 %v988
    %1314 = vmatpush1.bf16.msra.mxu0 %v987
    %1315 = vmatprep.subr.bf16.mxu0 %v992
    %1316 = vmatpush1.bf16.msra.mxu0 %v991
    %1317 = vmatprep.subr.bf16.mxu0 %v996
    %1318 = vmatpush1.bf16.msra.mxu0 %v995
    %1319 = vmatprep.subr.bf16.mxu0 %v1000
    %1320 = vmatpush1.bf16.msra.mxu0 %v999
    %1321 = vmatprep.subr.bf16.mxu0 %v1004
    %1322 = vmatpush1.bf16.msra.mxu0 %v1003
    %1323 = vmatprep.subr.bf16.mxu0 %v1008
    %1324 = vmatpush1.bf16.msra.mxu0 %v1007
    %1325 = vmatprep.subr.bf16.mxu0 %v1012
    %1326 = vmatpush1.bf16.msra.mxu0 %v1011
    %1327 = vmatprep.subr.bf16.mxu0 %v1016
    %1328 = vmatpush1.bf16.msra.mxu0 %v1015
    %1329 = vmatprep.subr.bf16.mxu0 %v1020
    %1330 = vmatpush1.bf16.msra.mxu0 %v1019
    %1331 = vmatprep.mubr.bf16.mxu0 %v420
    %1332 = vmatmul.mubr.bf16.gmra.mrb[0].mxu0 %v419
    %v1333 = vpop.f32.mrb[0].mxu0
    %v1334 = vadd.f32 %v564, %v1333
    %v1335 = vpop.f32.mrb[0].mxu0
    %v1336 = vadd.f32 %v568, %v1335
    %v1337 = vpop.f32.mrb[0].mxu0
    %v1338 = vadd.f32 %v564, %v1337
    %v1339 = vpop.f32.mrb[0].mxu0
    %v1340 = vadd.f32 %v568, %v1339
    %1341 = vdwg.mxu0
    %1342 = vmatprep.subr.bf16.mxu0 %v1024
    %1343 = vmatpush1.bf16.msra.mxu0 %v1023
    %1344 = vmatprep.subr.bf16.mxu0 %v1028
    %1345 = vmatpush1.bf16.msra.mxu0 %v1027
    %1346 = vmatprep.subr.bf16.mxu0 %v1032
    %1347 = vmatpush1.bf16.msra.mxu0 %v1031
    %1348 = vmatprep.subr.bf16.mxu0 %v1036
    %1349 = vmatpush1.bf16.msra.mxu0 %v1035
    %1350 = vmatprep.subr.bf16.mxu0 %v1040
    %1351 = vmatpush1.bf16.msra.mxu0 %v1039
    %1352 = vmatprep.subr.bf16.mxu0 %v1044
    %1353 = vmatpush1.bf16.msra.mxu0 %v1043
    %1354 = vmatprep.subr.bf16.mxu0 %v1048
    %1355 = vmatpush1.bf16.msra.mxu0 %v1047
    %1356 = vmatprep.subr.bf16.mxu0 %v1052
    %1357 = vmatpush1.bf16.msra.mxu0 %v1051
    %1358 = vmatprep.subr.bf16.mxu0 %v1056
    %1359 = vmatpush1.bf16.msra.mxu0 %v1055
    %1360 = vmatprep.subr.bf16.mxu0 %v1060
    %1361 = vmatpush1.bf16.msra.mxu0 %v1059
    %1362 = vmatprep.subr.bf16.mxu0 %v1064
    %1363 = vmatpush1.bf16.msra.mxu0 %v1063
    %1364 = vmatprep.subr.bf16.mxu0 %v1068
    %1365 = vmatpush1.bf16.msra.mxu0 %v1067
    %1366 = vmatprep.subr.bf16.mxu0 %v1072
    %1367 = vmatpush1.bf16.msra.mxu0 %v1071
    %1368 = vmatprep.subr.bf16.mxu0 %v1076
    %1369 = vmatpush1.bf16.msra.mxu0 %v1075
    %1370 = vmatprep.subr.bf16.mxu0 %v1080
    %1371 = vmatpush1.bf16.msra.mxu0 %v1079
    %1372 = vmatprep.subr.bf16.mxu0 %v1084
    %1373 = vmatpush1.bf16.msra.mxu0 %v1083
    %1374 = vmatprep.mubr.bf16.mxu0 %v422
    %1375 = vmatmul.mubr.bf16.gmra.mrb[0].mxu0 %v421
    %v1376 = vpop.f32.mrb[0].mxu0
    %v1377 = vadd.f32 %v1334, %v1376
    %v1378 = vpop.f32.mrb[0].mxu0
    %v1379 = vadd.f32 %v1336, %v1378
    %v1380 = vpop.f32.mrb[0].mxu0
    %v1381 = vadd.f32 %v1338, %v1380
    %v1382 = vpop.f32.mrb[0].mxu0
    %v1383 = vadd.f32 %v1340, %v1382
    %1384 = vdwg.mxu0
    %v1385 = vmax.f32 %v1291, 0.0
    %v1386 = vmax.f32 %v1293, 0.0
    %v1387 = vmax.f32 %v1377, 0.0
    %v1388 = vmax.f32 %v1379, 0.0
    %v1389 = vmax.f32 %v1295, 0.0
    %v1390 = vmax.f32 %v1297, 0.0
    %v1391 = vmax.f32 %v1381, 0.0
    %v1392 = vmax.f32 %v1383, 0.0
    %v1393 = vpack.c.bf16 %v1389, %v1385
    %v1394 = vpack.c.bf16 %v1390, %v1386
    %v1395 = vpack.c.bf16 %v1391, %v1387
    %v1396 = vpack.c.bf16 %v1392, %v1388
    %v1397 = vld [vmem:[#allocation8] sm:$0xff]
    %v1398 = vld [vmem:[#allocation8 + $0x8] sm:$0xff]
    %v1399 = vld [vmem:[#allocation8 + $0x10] sm:$0xff]
    %v1400 = vld [vmem:[#allocation8 + $0x18] sm:$0xff]
    %v1401 = vld [vmem:[#allocation8 + $0x20] sm:$0xff]
    %v1402 = vld [vmem:[#allocation8 + $0x28] sm:$0xff]
    %v1403 = vld [vmem:[#allocation8 + $0x30] sm:$0xff]
    %v1404 = vld [vmem:[#allocation8 + $0x38] sm:$0xff]
    %v1405 = vld [vmem:[#allocation8 + $0x40] sm:$0xff]
    %v1406 = vld [vmem:[#allocation8 + $0x48] sm:$0xff]
    %v1407 = vld [vmem:[#allocation8 + $0x50] sm:$0xff]
    %v1408 = vld [vmem:[#allocation8 + $0x58] sm:$0xff]
    %v1409 = vld [vmem:[#allocation8 + $0x60] sm:$0xff]
    %v1410 = vld [vmem:[#allocation8 + $0x68] sm:$0xff]
    %v1411 = vld [vmem:[#allocation8 + $0x70] sm:$0xff]
    %v1412 = vld [vmem:[#allocation8 + $0x78] sm:$0xff]
    %v1413 = vld [vmem:[#allocation8 + $0x80] sm:$0xff]
    %v1414 = vld [vmem:[#allocation8 + $0x88] sm:$0xff]
    %v1415 = vld [vmem:[#allocation8 + $0x90] sm:$0xff]
    %v1416 = vld [vmem:[#allocation8 + $0x98] sm:$0xff]
    %v1417 = vld [vmem:[#allocation8 + $0xa0] sm:$0xff]
    %v1418 = vld [vmem:[#allocation8 + $0xa8] sm:$0xff]
    %v1419 = vld [vmem:[#allocation8 + $0xb0] sm:$0xff]
    %v1420 = vld [vmem:[#allocation8 + $0xb8] sm:$0xff]
    %v1421 = vld [vmem:[#allocation8 + $0xc0] sm:$0xff]
    %v1422 = vld [vmem:[#allocation8 + $0xc8] sm:$0xff]
    %v1423 = vld [vmem:[#allocation8 + $0xd0] sm:$0xff]
    %v1424 = vld [vmem:[#allocation8 + $0xd8] sm:$0xff]
    %v1425 = vld [vmem:[#allocation8 + $0xe0] sm:$0xff]
    %v1426 = vld [vmem:[#allocation8 + $0xe8] sm:$0xff]
    %v1427 = vld [vmem:[#allocation8 + $0xf0] sm:$0xff]
    %v1428 = vld [vmem:[#allocation8 + $0xf8] sm:$0xff]
    %v1429 = vld [vmem:[#allocation8 + $0x100] sm:$0xff]
    %v1430 = vld [vmem:[#allocation8 + $0x108] sm:$0xff]
    %v1431 = vld [vmem:[#allocation8 + $0x110] sm:$0xff]
    %v1432 = vld [vmem:[#allocation8 + $0x118] sm:$0xff]
    %v1433 = vld [vmem:[#allocation8 + $0x120] sm:$0xff]
    %v1434 = vld [vmem:[#allocation8 + $0x128] sm:$0xff]
    %v1435 = vld [vmem:[#allocation8 + $0x130] sm:$0xff]
    %v1436 = vld [vmem:[#allocation8 + $0x138] sm:$0xff]
    %v1437 = vld [vmem:[#allocation8 + $0x140] sm:$0xff]
    %v1438 = vld [vmem:[#allocation8 + $0x148] sm:$0xff]
    %v1439 = vld [vmem:[#allocation8 + $0x150] sm:$0xff]
    %v1440 = vld [vmem:[#allocation8 + $0x158] sm:$0xff]
    %v1441 = vld [vmem:[#allocation8 + $0x160] sm:$0xff]
    %v1442 = vld [vmem:[#allocation8 + $0x168] sm:$0xff]
    %v1443 = vld [vmem:[#allocation8 + $0x170] sm:$0xff]
    %v1444 = vld [vmem:[#allocation8 + $0x178] sm:$0xff]
    %v1445 = vld [vmem:[#allocation8 + $0x180] sm:$0xff]
    %v1446 = vld [vmem:[#allocation8 + $0x188] sm:$0xff]
    %v1447 = vld [vmem:[#allocation8 + $0x190] sm:$0xff]
    %v1448 = vld [vmem:[#allocation8 + $0x198] sm:$0xff]
    %v1449 = vld [vmem:[#allocation8 + $0x1a0] sm:$0xff]
    %v1450 = vld [vmem:[#allocation8 + $0x1a8] sm:$0xff]
    %v1451 = vld [vmem:[#allocation8 + $0x1b0] sm:$0xff]
    %v1452 = vld [vmem:[#allocation8 + $0x1b8] sm:$0xff]
    %v1453 = vld [vmem:[#allocation8 + $0x1c0] sm:$0xff]
    %v1454 = vld [vmem:[#allocation8 + $0x1c8] sm:$0xff]
    %v1455 = vld [vmem:[#allocation8 + $0x1d0] sm:$0xff]
    %v1456 = vld [vmem:[#allocation8 + $0x1d8] sm:$0xff]
    %v1457 = vld [vmem:[#allocation8 + $0x1e0] sm:$0xff]
    %v1458 = vld [vmem:[#allocation8 + $0x1e8] sm:$0xff]
    %v1459 = vld [vmem:[#allocation8 + $0x1f0] sm:$0xff]
    %v1460 = vld [vmem:[#allocation8 + $0x1f8] sm:$0xff]
    %v1461 = vld [vmem:[#allocation8 + $0x200] sm:$0xff]
    %v1462 = vld [vmem:[#allocation8 + $0x208] sm:$0xff]
    %v1463 = vld [vmem:[#allocation8 + $0x210] sm:$0xff]
    %v1464 = vld [vmem:[#allocation8 + $0x218] sm:$0xff]
    %v1465 = vld [vmem:[#allocation8 + $0x220] sm:$0xff]
    %v1466 = vld [vmem:[#allocation8 + $0x228] sm:$0xff]
    %v1467 = vld [vmem:[#allocation8 + $0x230] sm:$0xff]
    %v1468 = vld [vmem:[#allocation8 + $0x238] sm:$0xff]
    %v1469 = vld [vmem:[#allocation8 + $0x240] sm:$0xff]
    %v1470 = vld [vmem:[#allocation8 + $0x248] sm:$0xff]
    %v1471 = vld [vmem:[#allocation8 + $0x250] sm:$0xff]
    %v1472 = vld [vmem:[#allocation8 + $0x258] sm:$0xff]
    %v1473 = vld [vmem:[#allocation8 + $0x260] sm:$0xff]
    %v1474 = vld [vmem:[#allocation8 + $0x268] sm:$0xff]
    %v1475 = vld [vmem:[#allocation8 + $0x270] sm:$0xff]
    %v1476 = vld [vmem:[#allocation8 + $0x278] sm:$0xff]
    %v1477 = vld [vmem:[#allocation8 + $0x280] sm:$0xff]
    %v1478 = vld [vmem:[#allocation8 + $0x288] sm:$0xff]
    %v1479 = vld [vmem:[#allocation8 + $0x290] sm:$0xff]
    %v1480 = vld [vmem:[#allocation8 + $0x298] sm:$0xff]
    %v1481 = vld [vmem:[#allocation8 + $0x2a0] sm:$0xff]
    %v1482 = vld [vmem:[#allocation8 + $0x2a8] sm:$0xff]
    %v1483 = vld [vmem:[#allocation8 + $0x2b0] sm:$0xff]
    %v1484 = vld [vmem:[#allocation8 + $0x2b8] sm:$0xff]
    %v1485 = vld [vmem:[#allocation8 + $0x2c0] sm:$0xff]
    %v1486 = vld [vmem:[#allocation8 + $0x2c8] sm:$0xff]
    %v1487 = vld [vmem:[#allocation8 + $0x2d0] sm:$0xff]
    %v1488 = vld [vmem:[#allocation8 + $0x2d8] sm:$0xff]
    %v1489 = vld [vmem:[#allocation8 + $0x2e0] sm:$0xff]
    %v1490 = vld [vmem:[#allocation8 + $0x2e8] sm:$0xff]
    %v1491 = vld [vmem:[#allocation8 + $0x2f0] sm:$0xff]
    %v1492 = vld [vmem:[#allocation8 + $0x2f8] sm:$0xff]
    %v1493 = vld [vmem:[#allocation8 + $0x300] sm:$0xff]
    %v1494 = vld [vmem:[#allocation8 + $0x308] sm:$0xff]
    %v1495 = vld [vmem:[#allocation8 + $0x310] sm:$0xff]
    %v1496 = vld [vmem:[#allocation8 + $0x318] sm:$0xff]
    %v1497 = vld [vmem:[#allocation8 + $0x320] sm:$0xff]
    %v1498 = vld [vmem:[#allocation8 + $0x328] sm:$0xff]
    %v1499 = vld [vmem:[#allocation8 + $0x330] sm:$0xff]
    %v1500 = vld [vmem:[#allocation8 + $0x338] sm:$0xff]
    %v1501 = vld [vmem:[#allocation8 + $0x340] sm:$0xff]
    %v1502 = vld [vmem:[#allocation8 + $0x348] sm:$0xff]
    %v1503 = vld [vmem:[#allocation8 + $0x350] sm:$0xff]
    %v1504 = vld [vmem:[#allocation8 + $0x358] sm:$0xff]
    %v1505 = vld [vmem:[#allocation8 + $0x360] sm:$0xff]
    %v1506 = vld [vmem:[#allocation8 + $0x368] sm:$0xff]
    %v1507 = vld [vmem:[#allocation8 + $0x370] sm:$0xff]
    %v1508 = vld [vmem:[#allocation8 + $0x378] sm:$0xff]
    %v1509 = vld [vmem:[#allocation8 + $0x380] sm:$0xff]
    %v1510 = vld [vmem:[#allocation8 + $0x388] sm:$0xff]
    %v1511 = vld [vmem:[#allocation8 + $0x390] sm:$0xff]
    %v1512 = vld [vmem:[#allocation8 + $0x398] sm:$0xff]
    %v1513 = vld [vmem:[#allocation8 + $0x3a0] sm:$0xff]
    %v1514 = vld [vmem:[#allocation8 + $0x3a8] sm:$0xff]
    %v1515 = vld [vmem:[#allocation8 + $0x3b0] sm:$0xff]
    %v1516 = vld [vmem:[#allocation8 + $0x3b8] sm:$0xff]
    %v1517 = vld [vmem:[#allocation8 + $0x3c0] sm:$0xff]
    %v1518 = vld [vmem:[#allocation8 + $0x3c8] sm:$0xff]
    %v1519 = vld [vmem:[#allocation8 + $0x3d0] sm:$0xff]
    %v1520 = vld [vmem:[#allocation8 + $0x3d8] sm:$0xff]
    %v1521 = vld [vmem:[#allocation8 + $0x3e0] sm:$0xff]
    %v1522 = vld [vmem:[#allocation8 + $0x3e8] sm:$0xff]
    %v1523 = vld [vmem:[#allocation8 + $0x3f0] sm:$0xff]
    %v1524 = vld [vmem:[#allocation8 + $0x3f8] sm:$0xff]
    %v1525 = vld [vmem:[%s6] sm:$0xf]
    %v1527 = vlaneseq
    %v1528 = vshrl.u32 %v1527, 7
    %v1529 = vsub.s32 0, %v1528
    %v1530 = vrot.slane %v1525, %v1529
    %v1531 = vlaneseq
    %v1532 = vshrl.u32 %v1531, 7
    %v1533 = vsub.s32 1, %v1532
    %v1534 = vrot.slane %v1525, %v1533
    %v1535 = vlaneseq
    %v1536 = vshrl.u32 %v1535, 7
    %v1537 = vsub.s32 2, %v1536
    %v1538 = vrot.slane %v1525, %v1537
    %v1539 = vlaneseq
    %v1540 = vshrl.u32 %v1539, 7
    %v1541 = vsub.s32 3, %v1540
    %v1542 = vrot.slane %v1525, %v1541
    %v1675 = vunpack.c.l.b16 %v1397
    %v1676 = vunpack.c.h.b16 %v1397
    %v1677 = vunpack.c.l.b16 %v1398
    %v1678 = vunpack.c.h.b16 %v1398
    %v1679 = vunpack.c.l.b16 %v1399
    %v1680 = vunpack.c.h.b16 %v1399
    %v1681 = vunpack.c.l.b16 %v1400
    %v1682 = vunpack.c.h.b16 %v1400
    %v1683 = vunpack.c.l.b16 %v1401
    %v1684 = vunpack.c.h.b16 %v1401
    %v1685 = vunpack.c.l.b16 %v1402
    %v1686 = vunpack.c.h.b16 %v1402
    %v1687 = vunpack.c.l.b16 %v1403
    %v1688 = vunpack.c.h.b16 %v1403
    %v1689 = vunpack.c.l.b16 %v1404
    %v1690 = vunpack.c.h.b16 %v1404
    %v1691 = vunpack.c.l.b16 %v1405
    %v1692 = vunpack.c.h.b16 %v1405
    %v1693 = vunpack.c.l.b16 %v1406
    %v1694 = vunpack.c.h.b16 %v1406
    %v1695 = vunpack.c.l.b16 %v1407
    %v1696 = vunpack.c.h.b16 %v1407
    %v1697 = vunpack.c.l.b16 %v1408
    %v1698 = vunpack.c.h.b16 %v1408
    %v1699 = vunpack.c.l.b16 %v1409
    %v1700 = vunpack.c.h.b16 %v1409
    %v1701 = vunpack.c.l.b16 %v1410
    %v1702 = vunpack.c.h.b16 %v1410
    %v1703 = vunpack.c.l.b16 %v1411
    %v1704 = vunpack.c.h.b16 %v1411
    %v1705 = vunpack.c.l.b16 %v1412
    %v1706 = vunpack.c.h.b16 %v1412
    %v1707 = vunpack.c.l.b16 %v1413
    %v1708 = vunpack.c.h.b16 %v1413
    %v1709 = vunpack.c.l.b16 %v1414
    %v1710 = vunpack.c.h.b16 %v1414
    %v1711 = vunpack.c.l.b16 %v1415
    %v1712 = vunpack.c.h.b16 %v1415
    %v1713 = vunpack.c.l.b16 %v1416
    %v1714 = vunpack.c.h.b16 %v1416
    %v1715 = vunpack.c.l.b16 %v1417
    %v1716 = vunpack.c.h.b16 %v1417
    %v1717 = vunpack.c.l.b16 %v1418
    %v1718 = vunpack.c.h.b16 %v1418
    %v1719 = vunpack.c.l.b16 %v1419
    %v1720 = vunpack.c.h.b16 %v1419
    %v1721 = vunpack.c.l.b16 %v1420
    %v1722 = vunpack.c.h.b16 %v1420
    %v1723 = vunpack.c.l.b16 %v1421
    %v1724 = vunpack.c.h.b16 %v1421
    %v1725 = vunpack.c.l.b16 %v1422
    %v1726 = vunpack.c.h.b16 %v1422
    %v1727 = vunpack.c.l.b16 %v1423
    %v1728 = vunpack.c.h.b16 %v1423
    %v1729 = vunpack.c.l.b16 %v1424
    %v1730 = vunpack.c.h.b16 %v1424
    %v1731 = vunpack.c.l.b16 %v1425
    %v1732 = vunpack.c.h.b16 %v1425
    %v1733 = vunpack.c.l.b16 %v1426
    %v1734 = vunpack.c.h.b16 %v1426
    %v1735 = vunpack.c.l.b16 %v1427
    %v1736 = vunpack.c.h.b16 %v1427
    %v1737 = vunpack.c.l.b16 %v1428
    %v1738 = vunpack.c.h.b16 %v1428
    %v1739 = vunpack.c.l.b16 %v1429
    %v1740 = vunpack.c.h.b16 %v1429
    %v1741 = vunpack.c.l.b16 %v1430
    %v1742 = vunpack.c.h.b16 %v1430
    %v1743 = vunpack.c.l.b16 %v1431
    %v1744 = vunpack.c.h.b16 %v1431
    %v1745 = vunpack.c.l.b16 %v1432
    %v1746 = vunpack.c.h.b16 %v1432
    %v1747 = vunpack.c.l.b16 %v1433
    %v1748 = vunpack.c.h.b16 %v1433
    %v1749 = vunpack.c.l.b16 %v1434
    %v1750 = vunpack.c.h.b16 %v1434
    %v1751 = vunpack.c.l.b16 %v1435
    %v1752 = vunpack.c.h.b16 %v1435
    %v1753 = vunpack.c.l.b16 %v1436
    %v1754 = vunpack.c.h.b16 %v1436
    %v1755 = vunpack.c.l.b16 %v1437
    %v1756 = vunpack.c.h.b16 %v1437
    %v1757 = vunpack.c.l.b16 %v1438
    %v1758 = vunpack.c.h.b16 %v1438
    %v1759 = vunpack.c.l.b16 %v1439
    %v1760 = vunpack.c.h.b16 %v1439
    %v1761 = vunpack.c.l.b16 %v1440
    %v1762 = vunpack.c.h.b16 %v1440
    %v1763 = vunpack.c.l.b16 %v1441
    %v1764 = vunpack.c.h.b16 %v1441
    %v1765 = vunpack.c.l.b16 %v1442
    %v1766 = vunpack.c.h.b16 %v1442
    %v1767 = vunpack.c.l.b16 %v1443
    %v1768 = vunpack.c.h.b16 %v1443
    %v1769 = vunpack.c.l.b16 %v1444
    %v1770 = vunpack.c.h.b16 %v1444
    %v1771 = vunpack.c.l.b16 %v1445
    %v1772 = vunpack.c.h.b16 %v1445
    %v1773 = vunpack.c.l.b16 %v1446
    %v1774 = vunpack.c.h.b16 %v1446
    %v1775 = vunpack.c.l.b16 %v1447
    %v1776 = vunpack.c.h.b16 %v1447
    %v1777 = vunpack.c.l.b16 %v1448
    %v1778 = vunpack.c.h.b16 %v1448
    %v1779 = vunpack.c.l.b16 %v1449
    %v1780 = vunpack.c.h.b16 %v1449
    %v1781 = vunpack.c.l.b16 %v1450
    %v1782 = vunpack.c.h.b16 %v1450
    %v1783 = vunpack.c.l.b16 %v1451
    %v1784 = vunpack.c.h.b16 %v1451
    %v1785 = vunpack.c.l.b16 %v1452
    %v1786 = vunpack.c.h.b16 %v1452
    %v1787 = vunpack.c.l.b16 %v1453
    %v1788 = vunpack.c.h.b16 %v1453
    %v1789 = vunpack.c.l.b16 %v1454
    %v1790 = vunpack.c.h.b16 %v1454
    %v1791 = vunpack.c.l.b16 %v1455
    %v1792 = vunpack.c.h.b16 %v1455
    %v1793 = vunpack.c.l.b16 %v1456
    %v1794 = vunpack.c.h.b16 %v1456
    %v1795 = vunpack.c.l.b16 %v1457
    %v1796 = vunpack.c.h.b16 %v1457
    %v1797 = vunpack.c.l.b16 %v1458
    %v1798 = vunpack.c.h.b16 %v1458
    %v1799 = vunpack.c.l.b16 %v1459
    %v1800 = vunpack.c.h.b16 %v1459
    %v1801 = vunpack.c.l.b16 %v1460
    %v1802 = vunpack.c.h.b16 %v1460
    %v1803 = vunpack.c.l.b16 %v1461
    %v1804 = vunpack.c.h.b16 %v1461
    %v1805 = vunpack.c.l.b16 %v1462
    %v1806 = vunpack.c.h.b16 %v1462
    %v1807 = vunpack.c.l.b16 %v1463
    %v1808 = vunpack.c.h.b16 %v1463
    %v1809 = vunpack.c.l.b16 %v1464
    %v1810 = vunpack.c.h.b16 %v1464
    %v1811 = vunpack.c.l.b16 %v1465
    %v1812 = vunpack.c.h.b16 %v1465
    %v1813 = vunpack.c.l.b16 %v1466
    %v1814 = vunpack.c.h.b16 %v1466
    %v1815 = vunpack.c.l.b16 %v1467
    %v1816 = vunpack.c.h.b16 %v1467
    %v1817 = vunpack.c.l.b16 %v1468
    %v1818 = vunpack.c.h.b16 %v1468
    %v1819 = vunpack.c.l.b16 %v1469
    %v1820 = vunpack.c.h.b16 %v1469
    %v1821 = vunpack.c.l.b16 %v1470
    %v1822 = vunpack.c.h.b16 %v1470
    %v1823 = vunpack.c.l.b16 %v1471
    %v1824 = vunpack.c.h.b16 %v1471
    %v1825 = vunpack.c.l.b16 %v1472
    %v1826 = vunpack.c.h.b16 %v1472
    %v1827 = vunpack.c.l.b16 %v1473
    %v1828 = vunpack.c.h.b16 %v1473
    %v1829 = vunpack.c.l.b16 %v1474
    %v1830 = vunpack.c.h.b16 %v1474
    %v1831 = vunpack.c.l.b16 %v1475
    %v1832 = vunpack.c.h.b16 %v1475
    %v1833 = vunpack.c.l.b16 %v1476
    %v1834 = vunpack.c.h.b16 %v1476
    %v1835 = vunpack.c.l.b16 %v1477
    %v1836 = vunpack.c.h.b16 %v1477
    %v1837 = vunpack.c.l.b16 %v1478
    %v1838 = vunpack.c.h.b16 %v1478
    %v1839 = vunpack.c.l.b16 %v1479
    %v1840 = vunpack.c.h.b16 %v1479
    %v1841 = vunpack.c.l.b16 %v1480
    %v1842 = vunpack.c.h.b16 %v1480
    %v1843 = vunpack.c.l.b16 %v1481
    %v1844 = vunpack.c.h.b16 %v1481
    %v1845 = vunpack.c.l.b16 %v1482
    %v1846 = vunpack.c.h.b16 %v1482
    %v1847 = vunpack.c.l.b16 %v1483
    %v1848 = vunpack.c.h.b16 %v1483
    %v1849 = vunpack.c.l.b16 %v1484
    %v1850 = vunpack.c.h.b16 %v1484
    %v1851 = vunpack.c.l.b16 %v1485
    %v1852 = vunpack.c.h.b16 %v1485
    %v1853 = vunpack.c.l.b16 %v1486
    %v1854 = vunpack.c.h.b16 %v1486
    %v1855 = vunpack.c.l.b16 %v1487
    %v1856 = vunpack.c.h.b16 %v1487
    %v1857 = vunpack.c.l.b16 %v1488
    %v1858 = vunpack.c.h.b16 %v1488
    %v1859 = vunpack.c.l.b16 %v1489
    %v1860 = vunpack.c.h.b16 %v1489
    %v1861 = vunpack.c.l.b16 %v1490
    %v1862 = vunpack.c.h.b16 %v1490
    %v1863 = vunpack.c.l.b16 %v1491
    %v1864 = vunpack.c.h.b16 %v1491
    %v1865 = vunpack.c.l.b16 %v1492
    %v1866 = vunpack.c.h.b16 %v1492
    %v1867 = vunpack.c.l.b16 %v1493
    %v1868 = vunpack.c.h.b16 %v1493
    %v1869 = vunpack.c.l.b16 %v1494
    %v1870 = vunpack.c.h.b16 %v1494
    %v1871 = vunpack.c.l.b16 %v1495
    %v1872 = vunpack.c.h.b16 %v1495
    %v1873 = vunpack.c.l.b16 %v1496
    %v1874 = vunpack.c.h.b16 %v1496
    %v1875 = vunpack.c.l.b16 %v1497
    %v1876 = vunpack.c.h.b16 %v1497
    %v1877 = vunpack.c.l.b16 %v1498
    %v1878 = vunpack.c.h.b16 %v1498
    %v1879 = vunpack.c.l.b16 %v1499
    %v1880 = vunpack.c.h.b16 %v1499
    %v1881 = vunpack.c.l.b16 %v1500
    %v1882 = vunpack.c.h.b16 %v1500
    %v1883 = vunpack.c.l.b16 %v1501
    %v1884 = vunpack.c.h.b16 %v1501
    %v1885 = vunpack.c.l.b16 %v1502
    %v1886 = vunpack.c.h.b16 %v1502
    %v1887 = vunpack.c.l.b16 %v1503
    %v1888 = vunpack.c.h.b16 %v1503
    %v1889 = vunpack.c.l.b16 %v1504
    %v1890 = vunpack.c.h.b16 %v1504
    %v1891 = vunpack.c.l.b16 %v1505
    %v1892 = vunpack.c.h.b16 %v1505
    %v1893 = vunpack.c.l.b16 %v1506
    %v1894 = vunpack.c.h.b16 %v1506
    %v1895 = vunpack.c.l.b16 %v1507
    %v1896 = vunpack.c.h.b16 %v1507
    %v1897 = vunpack.c.l.b16 %v1508
    %v1898 = vunpack.c.h.b16 %v1508
    %v1899 = vunpack.c.l.b16 %v1509
    %v1900 = vunpack.c.h.b16 %v1509
    %v1901 = vunpack.c.l.b16 %v1510
    %v1902 = vunpack.c.h.b16 %v1510
    %v1903 = vunpack.c.l.b16 %v1511
    %v1904 = vunpack.c.h.b16 %v1511
    %v1905 = vunpack.c.l.b16 %v1512
    %v1906 = vunpack.c.h.b16 %v1512
    %v1907 = vunpack.c.l.b16 %v1513
    %v1908 = vunpack.c.h.b16 %v1513
    %v1909 = vunpack.c.l.b16 %v1514
    %v1910 = vunpack.c.h.b16 %v1514
    %v1911 = vunpack.c.l.b16 %v1515
    %v1912 = vunpack.c.h.b16 %v1515
    %v1913 = vunpack.c.l.b16 %v1516
    %v1914 = vunpack.c.h.b16 %v1516
    %v1915 = vunpack.c.l.b16 %v1517
    %v1916 = vunpack.c.h.b16 %v1517
    %v1917 = vunpack.c.l.b16 %v1518
    %v1918 = vunpack.c.h.b16 %v1518
    %v1919 = vunpack.c.l.b16 %v1519
    %v1920 = vunpack.c.h.b16 %v1519
    %v1921 = vunpack.c.l.b16 %v1520
    %v1922 = vunpack.c.h.b16 %v1520
    %v1923 = vunpack.c.l.b16 %v1521
    %v1924 = vunpack.c.h.b16 %v1521
    %v1925 = vunpack.c.l.b16 %v1522
    %v1926 = vunpack.c.h.b16 %v1522
    %v1927 = vunpack.c.l.b16 %v1523
    %v1928 = vunpack.c.h.b16 %v1523
    %v1929 = vunpack.c.l.b16 %v1524
    %v1930 = vunpack.c.h.b16 %v1524
    %v1931 = vpack.c.b16 %v1679, %v1675
    %v1932 = vpack.c.b16 %v1680, %v1676
    %v1933 = vpack.c.b16 %v1681, %v1677
    %v1934 = vpack.c.b16 %v1682, %v1678
    %v1935 = vpack.c.b16 %v1687, %v1683
    %v1936 = vpack.c.b16 %v1688, %v1684
    %v1937 = vpack.c.b16 %v1689, %v1685
    %v1938 = vpack.c.b16 %v1690, %v1686
    %v1939 = vpack.c.b16 %v1695, %v1691
    %v1940 = vpack.c.b16 %v1696, %v1692
    %v1941 = vpack.c.b16 %v1697, %v1693
    %v1942 = vpack.c.b16 %v1698, %v1694
    %v1943 = vpack.c.b16 %v1703, %v1699
    %v1944 = vpack.c.b16 %v1704, %v1700
    %v1945 = vpack.c.b16 %v1705, %v1701
    %v1946 = vpack.c.b16 %v1706, %v1702
    %v1947 = vpack.c.b16 %v1711, %v1707
    %v1948 = vpack.c.b16 %v1712, %v1708
    %v1949 = vpack.c.b16 %v1713, %v1709
    %v1950 = vpack.c.b16 %v1714, %v1710
    %v1951 = vpack.c.b16 %v1719, %v1715
    %v1952 = vpack.c.b16 %v1720, %v1716
    %v1953 = vpack.c.b16 %v1721, %v1717
    %v1954 = vpack.c.b16 %v1722, %v1718
    %v1955 = vpack.c.b16 %v1727, %v1723
    %v1956 = vpack.c.b16 %v1728, %v1724
    %v1957 = vpack.c.b16 %v1729, %v1725
    %v1958 = vpack.c.b16 %v1730, %v1726
    %v1959 = vpack.c.b16 %v1735, %v1731
    %v1960 = vpack.c.b16 %v1736, %v1732
    %v1961 = vpack.c.b16 %v1737, %v1733
    %v1962 = vpack.c.b16 %v1738, %v1734
    %v1963 = vpack.c.b16 %v1743, %v1739
    %v1964 = vpack.c.b16 %v1744, %v1740
    %v1965 = vpack.c.b16 %v1745, %v1741
    %v1966 = vpack.c.b16 %v1746, %v1742
    %v1967 = vpack.c.b16 %v1751, %v1747
    %v1968 = vpack.c.b16 %v1752, %v1748
    %v1969 = vpack.c.b16 %v1753, %v1749
    %v1970 = vpack.c.b16 %v1754, %v1750
    %v1971 = vpack.c.b16 %v1759, %v1755
    %v1972 = vpack.c.b16 %v1760, %v1756
    %v1973 = vpack.c.b16 %v1761, %v1757
    %v1974 = vpack.c.b16 %v1762, %v1758
    %v1975 = vpack.c.b16 %v1767, %v1763
    %v1976 = vpack.c.b16 %v1768, %v1764
    %v1977 = vpack.c.b16 %v1769, %v1765
    %v1978 = vpack.c.b16 %v1770, %v1766
    %v1979 = vpack.c.b16 %v1775, %v1771
    %v1980 = vpack.c.b16 %v1776, %v1772
    %v1981 = vpack.c.b16 %v1777, %v1773
    %v1982 = vpack.c.b16 %v1778, %v1774
    %v1983 = vpack.c.b16 %v1783, %v1779
    %v1984 = vpack.c.b16 %v1784, %v1780
    %v1985 = vpack.c.b16 %v1785, %v1781
    %v1986 = vpack.c.b16 %v1786, %v1782
    %v1987 = vpack.c.b16 %v1791, %v1787
    %v1988 = vpack.c.b16 %v1792, %v1788
    %v1989 = vpack.c.b16 %v1793, %v1789
    %v1990 = vpack.c.b16 %v1794, %v1790
    %v1991 = vpack.c.b16 %v1799, %v1795
    %v1992 = vpack.c.b16 %v1800, %v1796
    %v1993 = vpack.c.b16 %v1801, %v1797
    %v1994 = vpack.c.b16 %v1802, %v1798
    %v1995 = vpack.c.b16 %v1807, %v1803
    %v1996 = vpack.c.b16 %v1808, %v1804
    %v1997 = vpack.c.b16 %v1809, %v1805
    %v1998 = vpack.c.b16 %v1810, %v1806
    %v1999 = vpack.c.b16 %v1815, %v1811
    %v2000 = vpack.c.b16 %v1816, %v1812
    %v2001 = vpack.c.b16 %v1817, %v1813
    %v2002 = vpack.c.b16 %v1818, %v1814
    %v2003 = vpack.c.b16 %v1823, %v1819
    %v2004 = vpack.c.b16 %v1824, %v1820
    %v2005 = vpack.c.b16 %v1825, %v1821
    %v2006 = vpack.c.b16 %v1826, %v1822
    %v2007 = vpack.c.b16 %v1831, %v1827
    %v2008 = vpack.c.b16 %v1832, %v1828
    %v2009 = vpack.c.b16 %v1833, %v1829
    %v2010 = vpack.c.b16 %v1834, %v1830
    %v2011 = vpack.c.b16 %v1839, %v1835
    %v2012 = vpack.c.b16 %v1840, %v1836
    %v2013 = vpack.c.b16 %v1841, %v1837
    %v2014 = vpack.c.b16 %v1842, %v1838
    %v2015 = vpack.c.b16 %v1847, %v1843
    %v2016 = vpack.c.b16 %v1848, %v1844
    %v2017 = vpack.c.b16 %v1849, %v1845
    %v2018 = vpack.c.b16 %v1850, %v1846
    %v2019 = vpack.c.b16 %v1855, %v1851
    %v2020 = vpack.c.b16 %v1856, %v1852
    %v2021 = vpack.c.b16 %v1857, %v1853
    %v2022 = vpack.c.b16 %v1858, %v1854
    %v2023 = vpack.c.b16 %v1863, %v1859
    %v2024 = vpack.c.b16 %v1864, %v1860
    %v2025 = vpack.c.b16 %v1865, %v1861
    %v2026 = vpack.c.b16 %v1866, %v1862
    %v2027 = vpack.c.b16 %v1871, %v1867
    %v2028 = vpack.c.b16 %v1872, %v1868
    %v2029 = vpack.c.b16 %v1873, %v1869
    %v2030 = vpack.c.b16 %v1874, %v1870
    %v2031 = vpack.c.b16 %v1879, %v1875
    %v2032 = vpack.c.b16 %v1880, %v1876
    %v2033 = vpack.c.b16 %v1881, %v1877
    %v2034 = vpack.c.b16 %v1882, %v1878
    %v2035 = vpack.c.b16 %v1887, %v1883
    %v2036 = vpack.c.b16 %v1888, %v1884
    %v2037 = vpack.c.b16 %v1889, %v1885
    %v2038 = vpack.c.b16 %v1890, %v1886
    %v2039 = vpack.c.b16 %v1895, %v1891
    %v2040 = vpack.c.b16 %v1896, %v1892
    %v2041 = vpack.c.b16 %v1897, %v1893
    %v2042 = vpack.c.b16 %v1898, %v1894
    %v2043 = vpack.c.b16 %v1903, %v1899
    %v2044 = vpack.c.b16 %v1904, %v1900
    %v2045 = vpack.c.b16 %v1905, %v1901
    %v2046 = vpack.c.b16 %v1906, %v1902
    %v2047 = vpack.c.b16 %v1911, %v1907
    %v2048 = vpack.c.b16 %v1912, %v1908
    %v2049 = vpack.c.b16 %v1913, %v1909
    %v2050 = vpack.c.b16 %v1914, %v1910
    %v2051 = vpack.c.b16 %v1919, %v1915
    %v2052 = vpack.c.b16 %v1920, %v1916
    %v2053 = vpack.c.b16 %v1921, %v1917
    %v2054 = vpack.c.b16 %v1922, %v1918
    %v2055 = vpack.c.b16 %v1927, %v1923
    %v2056 = vpack.c.b16 %v1928, %v1924
    %v2057 = vpack.c.b16 %v1929, %v1925
    %v2058 = vpack.c.b16 %v1930, %v1926
    %2187 = vmatprep.subr.bf16.mxu0 %v1932
    %2188 = vmatpush1.bf16.msra.mxu0 %v1931
    %2189 = vmatprep.subr.bf16.mxu0 %v1936
    %2190 = vmatpush1.bf16.msra.mxu0 %v1935
    %2191 = vmatprep.subr.bf16.mxu0 %v1940
    %2192 = vmatpush1.bf16.msra.mxu0 %v1939
    %2193 = vmatprep.subr.bf16.mxu0 %v1944
    %2194 = vmatpush1.bf16.msra.mxu0 %v1943
    %2195 = vmatprep.subr.bf16.mxu0 %v1948
    %2196 = vmatpush1.bf16.msra.mxu0 %v1947
    %2197 = vmatprep.subr.bf16.mxu0 %v1952
    %2198 = vmatpush1.bf16.msra.mxu0 %v1951
    %2199 = vmatprep.subr.bf16.mxu0 %v1956
    %2200 = vmatpush1.bf16.msra.mxu0 %v1955
    %2201 = vmatprep.subr.bf16.mxu0 %v1960
    %2202 = vmatpush1.bf16.msra.mxu0 %v1959
    %2203 = vmatprep.subr.bf16.mxu0 %v1964
    %2204 = vmatpush1.bf16.msra.mxu0 %v1963
    %2205 = vmatprep.subr.bf16.mxu0 %v1968
    %2206 = vmatpush1.bf16.msra.mxu0 %v1967
    %2207 = vmatprep.subr.bf16.mxu0 %v1972
    %2208 = vmatpush1.bf16.msra.mxu0 %v1971
    %2209 = vmatprep.subr.bf16.mxu0 %v1976
    %2210 = vmatpush1.bf16.msra.mxu0 %v1975
    %2211 = vmatprep.subr.bf16.mxu0 %v1980
    %2212 = vmatpush1.bf16.msra.mxu0 %v1979
    %2213 = vmatprep.subr.bf16.mxu0 %v1984
    %2214 = vmatpush1.bf16.msra.mxu0 %v1983
    %2215 = vmatprep.subr.bf16.mxu0 %v1988
    %2216 = vmatpush1.bf16.msra.mxu0 %v1987
    %2217 = vmatprep.subr.bf16.mxu0 %v1992
    %2218 = vmatpush1.bf16.msra.mxu0 %v1991
    %2219 = vmatprep.mubr.bf16.mxu0 %v1394
    %2220 = vmatmul.mubr.bf16.gmra.mrb[0].mxu0 %v1393
    %v2221 = vpop.f32.mrb[0].mxu0
    %v2222 = vadd.f32 %v1530, %v2221
    %v2223 = vpop.f32.mrb[0].mxu0
    %v2224 = vadd.f32 %v1534, %v2223
    %v2225 = vpop.f32.mrb[0].mxu0
    %v2226 = vadd.f32 %v1530, %v2225
    %v2227 = vpop.f32.mrb[0].mxu0
    %v2228 = vadd.f32 %v1534, %v2227
    %2229 = vdwg.mxu0
    %2230 = vmatprep.subr.bf16.mxu0 %v1996
    %2231 = vmatpush1.bf16.msra.mxu0 %v1995
    %2232 = vmatprep.subr.bf16.mxu0 %v2000
    %2233 = vmatpush1.bf16.msra.mxu0 %v1999
    %2234 = vmatprep.subr.bf16.mxu0 %v2004
    %2235 = vmatpush1.bf16.msra.mxu0 %v2003
    %2236 = vmatprep.subr.bf16.mxu0 %v2008
    %2237 = vmatpush1.bf16.msra.mxu0 %v2007
    %2238 = vmatprep.subr.bf16.mxu0 %v2012
    %2239 = vmatpush1.bf16.msra.mxu0 %v2011
    %2240 = vmatprep.subr.bf16.mxu0 %v2016
    %2241 = vmatpush1.bf16.msra.mxu0 %v2015
    %2242 = vmatprep.subr.bf16.mxu0 %v2020
    %2243 = vmatpush1.bf16.msra.mxu0 %v2019
    %2244 = vmatprep.subr.bf16.mxu0 %v2024
    %2245 = vmatpush1.bf16.msra.mxu0 %v2023
    %2246 = vmatprep.subr.bf16.mxu0 %v2028
    %2247 = vmatpush1.bf16.msra.mxu0 %v2027
    %2248 = vmatprep.subr.bf16.mxu0 %v2032
    %2249 = vmatpush1.bf16.msra.mxu0 %v2031
    %2250 = vmatprep.subr.bf16.mxu0 %v2036
    %2251 = vmatpush1.bf16.msra.mxu0 %v2035
    %2252 = vmatprep.subr.bf16.mxu0 %v2040
    %2253 = vmatpush1.bf16.msra.mxu0 %v2039
    %2254 = vmatprep.subr.bf16.mxu0 %v2044
    %2255 = vmatpush1.bf16.msra.mxu0 %v2043
    %2256 = vmatprep.subr.bf16.mxu0 %v2048
    %2257 = vmatpush1.bf16.msra.mxu0 %v2047
    %2258 = vmatprep.subr.bf16.mxu0 %v2052
    %2259 = vmatpush1.bf16.msra.mxu0 %v2051
    %2260 = vmatprep.subr.bf16.mxu0 %v2056
    %2261 = vmatpush1.bf16.msra.mxu0 %v2055
    %2262 = vmatprep.mubr.bf16.mxu0 %v1396
    %2263 = vmatmul.mubr.bf16.gmra.mrb[0].mxu0 %v1395
    %v2264 = vpop.f32.mrb[0].mxu0
    %v2265 = vadd.f32 %v2222, %v2264
    %v2266 = vpop.f32.mrb[0].mxu0
    %v2267 = vadd.f32 %v2224, %v2266
    %v2268 = vpop.f32.mrb[0].mxu0
    %v2269 = vadd.f32 %v2226, %v2268
    %v2270 = vpop.f32.mrb[0].mxu0
    %v2271 = vadd.f32 %v2228, %v2270
    %2272 = vdwg.mxu0
    %2273 = vmatprep.subr.bf16.mxu0 %v1934
    %2274 = vmatpush1.bf16.msra.mxu0 %v1933
    %2275 = vmatprep.subr.bf16.mxu0 %v1938
    %2276 = vmatpush1.bf16.msra.mxu0 %v1937
    %2277 = vmatprep.subr.bf16.mxu0 %v1942
    %2278 = vmatpush1.bf16.msra.mxu0 %v1941
    %2279 = vmatprep.subr.bf16.mxu0 %v1946
    %2280 = vmatpush1.bf16.msra.mxu0 %v1945
    %2281 = vmatprep.subr.bf16.mxu0 %v1950
    %2282 = vmatpush1.bf16.msra.mxu0 %v1949
    %2283 = vmatprep.subr.bf16.mxu0 %v1954
    %2284 = vmatpush1.bf16.msra.mxu0 %v1953
    %2285 = vmatprep.subr.bf16.mxu0 %v1958
    %2286 = vmatpush1.bf16.msra.mxu0 %v1957
    %2287 = vmatprep.subr.bf16.mxu0 %v1962
    %2288 = vmatpush1.bf16.msra.mxu0 %v1961
    %2289 = vmatprep.subr.bf16.mxu0 %v1966
    %2290 = vmatpush1.bf16.msra.mxu0 %v1965
    %2291 = vmatprep.subr.bf16.mxu0 %v1970
    %2292 = vmatpush1.bf16.msra.mxu0 %v1969
    %2293 = vmatprep.subr.bf16.mxu0 %v1974
    %2294 = vmatpush1.bf16.msra.mxu0 %v1973
    %2295 = vmatprep.subr.bf16.mxu0 %v1978
    %2296 = vmatpush1.bf16.msra.mxu0 %v1977
    %2297 = vmatprep.subr.bf16.mxu0 %v1982
    %2298 = vmatpush1.bf16.msra.mxu0 %v1981
    %2299 = vmatprep.subr.bf16.mxu0 %v1986
    %2300 = vmatpush1.bf16.msra.mxu0 %v1985
    %2301 = vmatprep.subr.bf16.mxu0 %v1990
    %2302 = vmatpush1.bf16.msra.mxu0 %v1989
    %2303 = vmatprep.subr.bf16.mxu0 %v1994
    %2304 = vmatpush1.bf16.msra.mxu0 %v1993
    %2305 = vmatprep.mubr.bf16.mxu0 %v1394
    %2306 = vmatmul.mubr.bf16.gmra.mrb[0].mxu0 %v1393
    %v2307 = vpop.f32.mrb[0].mxu0
    %v2308 = vadd.f32 %v1538, %v2307
    %v2309 = vpop.f32.mrb[0].mxu0
    %v2310 = vadd.f32 %v1542, %v2309
    %v2311 = vpop.f32.mrb[0].mxu0
    %v2312 = vadd.f32 %v1538, %v2311
    %v2313 = vpop.f32.mrb[0].mxu0
    %v2314 = vadd.f32 %v1542, %v2313
    %2315 = vdwg.mxu0
    %2316 = vmatprep.subr.bf16.mxu0 %v1998
    %2317 = vmatpush1.bf16.msra.mxu0 %v1997
    %2318 = vmatprep.subr.bf16.mxu0 %v2002
    %2319 = vmatpush1.bf16.msra.mxu0 %v2001
    %2320 = vmatprep.subr.bf16.mxu0 %v2006
    %2321 = vmatpush1.bf16.msra.mxu0 %v2005
    %2322 = vmatprep.subr.bf16.mxu0 %v2010
    %2323 = vmatpush1.bf16.msra.mxu0 %v2009
    %2324 = vmatprep.subr.bf16.mxu0 %v2014
    %2325 = vmatpush1.bf16.msra.mxu0 %v2013
    %2326 = vmatprep.subr.bf16.mxu0 %v2018
    %2327 = vmatpush1.bf16.msra.mxu0 %v2017
    %2328 = vmatprep.subr.bf16.mxu0 %v2022
    %2329 = vmatpush1.bf16.msra.mxu0 %v2021
    %2330 = vmatprep.subr.bf16.mxu0 %v2026
    %2331 = vmatpush1.bf16.msra.mxu0 %v2025
    %2332 = vmatprep.subr.bf16.mxu0 %v2030
    %2333 = vmatpush1.bf16.msra.mxu0 %v2029
    %2334 = vmatprep.subr.bf16.mxu0 %v2034
    %2335 = vmatpush1.bf16.msra.mxu0 %v2033
    %2336 = vmatprep.subr.bf16.mxu0 %v2038
    %2337 = vmatpush1.bf16.msra.mxu0 %v2037
    %2338 = vmatprep.subr.bf16.mxu0 %v2042
    %2339 = vmatpush1.bf16.msra.mxu0 %v2041
    %2340 = vmatprep.subr.bf16.mxu0 %v2046
    %2341 = vmatpush1.bf16.msra.mxu0 %v2045
    %2342 = vmatprep.subr.bf16.mxu0 %v2050
    %2343 = vmatpush1.bf16.msra.mxu0 %v2049
    %2344 = vmatprep.subr.bf16.mxu0 %v2054
    %2345 = vmatpush1.bf16.msra.mxu0 %v2053
    %2346 = vmatprep.subr.bf16.mxu0 %v2058
    %2347 = vmatpush1.bf16.msra.mxu0 %v2057
    %2348 = vmatprep.mubr.bf16.mxu0 %v1396
    %2349 = vmatmul.mubr.bf16.gmra.mrb[0].mxu0 %v1395
    %v2350 = vpop.f32.mrb[0].mxu0
    %v2351 = vadd.f32 %v2308, %v2350
    %v2352 = vpop.f32.mrb[0].mxu0
    %v2353 = vadd.f32 %v2310, %v2352
    %v2354 = vpop.f32.mrb[0].mxu0
    %v2355 = vadd.f32 %v2312, %v2354
    %v2356 = vpop.f32.mrb[0].mxu0
    %v2357 = vadd.f32 %v2314, %v2356
    %2358 = vdwg.mxu0
    %v2359 = vmax.f32 %v2265, 0.0
    %v2360 = vmax.f32 %v2267, 0.0
    %v2361 = vmax.f32 %v2351, 0.0
    %v2362 = vmax.f32 %v2353, 0.0
    %v2363 = vmax.f32 %v2269, 0.0
    %v2364 = vmax.f32 %v2271, 0.0
    %v2365 = vmax.f32 %v2355, 0.0
    %v2366 = vmax.f32 %v2357, 0.0
    %v2367 = vpack.c.bf16 %v2363, %v2359
    %v2368 = vpack.c.bf16 %v2364, %v2360
    %v2369 = vpack.c.bf16 %v2365, %v2361
    %v2370 = vpack.c.bf16 %v2366, %v2362
    %v2371 = vld [vmem:[#allocation10] sm:$0xff]
    %v2372 = vld [vmem:[#allocation10 + $0x8] sm:$0xff]
    %v2373 = vld [vmem:[#allocation10 + $0x10] sm:$0xff]
    %v2374 = vld [vmem:[#allocation10 + $0x18] sm:$0xff]
    %v2375 = vld [vmem:[#allocation10 + $0x20] sm:$0xff]
    %v2376 = vld [vmem:[#allocation10 + $0x28] sm:$0xff]
    %v2377 = vld [vmem:[#allocation10 + $0x30] sm:$0xff]
    %v2378 = vld [vmem:[#allocation10 + $0x38] sm:$0xff]
    %v2379 = vld [vmem:[#allocation10 + $0x40] sm:$0xff]
    %v2380 = vld [vmem:[#allocation10 + $0x48] sm:$0xff]
    %v2381 = vld [vmem:[#allocation10 + $0x50] sm:$0xff]
    %v2382 = vld [vmem:[#allocation10 + $0x58] sm:$0xff]
    %v2383 = vld [vmem:[#allocation10 + $0x60] sm:$0xff]
    %v2384 = vld [vmem:[#allocation10 + $0x68] sm:$0xff]
    %v2385 = vld [vmem:[#allocation10 + $0x70] sm:$0xff]
    %v2386 = vld [vmem:[#allocation10 + $0x78] sm:$0xff]
    %v2387 = vld [vmem:[#allocation10 + $0x80] sm:$0xff]
    %v2388 = vld [vmem:[#allocation10 + $0x88] sm:$0xff]
    %v2389 = vld [vmem:[#allocation10 + $0x90] sm:$0xff]
    %v2390 = vld [vmem:[#allocation10 + $0x98] sm:$0xff]
    %v2391 = vld [vmem:[#allocation10 + $0xa0] sm:$0xff]
    %v2392 = vld [vmem:[#allocation10 + $0xa8] sm:$0xff]
    %v2393 = vld [vmem:[#allocation10 + $0xb0] sm:$0xff]
    %v2394 = vld [vmem:[#allocation10 + $0xb8] sm:$0xff]
    %v2395 = vld [vmem:[#allocation10 + $0xc0] sm:$0xff]
    %v2396 = vld [vmem:[#allocation10 + $0xc8] sm:$0xff]
    %v2397 = vld [vmem:[#allocation10 + $0xd0] sm:$0xff]
    %v2398 = vld [vmem:[#allocation10 + $0xd8] sm:$0xff]
    %v2399 = vld [vmem:[#allocation10 + $0xe0] sm:$0xff]
    %v2400 = vld [vmem:[#allocation10 + $0xe8] sm:$0xff]
    %v2401 = vld [vmem:[#allocation10 + $0xf0] sm:$0xff]
    %v2402 = vld [vmem:[#allocation10 + $0xf8] sm:$0xff]
    %v2403 = vld [vmem:[#allocation10 + $0x100] sm:$0xff]
    %v2404 = vld [vmem:[#allocation10 + $0x108] sm:$0xff]
    %v2405 = vld [vmem:[#allocation10 + $0x110] sm:$0xff]
    %v2406 = vld [vmem:[#allocation10 + $0x118] sm:$0xff]
    %v2407 = vld [vmem:[#allocation10 + $0x120] sm:$0xff]
    %v2408 = vld [vmem:[#allocation10 + $0x128] sm:$0xff]
    %v2409 = vld [vmem:[#allocation10 + $0x130] sm:$0xff]
    %v2410 = vld [vmem:[#allocation10 + $0x138] sm:$0xff]
    %v2411 = vld [vmem:[#allocation10 + $0x140] sm:$0xff]
    %v2412 = vld [vmem:[#allocation10 + $0x148] sm:$0xff]
    %v2413 = vld [vmem:[#allocation10 + $0x150] sm:$0xff]
    %v2414 = vld [vmem:[#allocation10 + $0x158] sm:$0xff]
    %v2415 = vld [vmem:[#allocation10 + $0x160] sm:$0xff]
    %v2416 = vld [vmem:[#allocation10 + $0x168] sm:$0xff]
    %v2417 = vld [vmem:[#allocation10 + $0x170] sm:$0xff]
    %v2418 = vld [vmem:[#allocation10 + $0x178] sm:$0xff]
    %v2419 = vld [vmem:[#allocation10 + $0x180] sm:$0xff]
    %v2420 = vld [vmem:[#allocation10 + $0x188] sm:$0xff]
    %v2421 = vld [vmem:[#allocation10 + $0x190] sm:$0xff]
    %v2422 = vld [vmem:[#allocation10 + $0x198] sm:$0xff]
    %v2423 = vld [vmem:[#allocation10 + $0x1a0] sm:$0xff]
    %v2424 = vld [vmem:[#allocation10 + $0x1a8] sm:$0xff]
    %v2425 = vld [vmem:[#allocation10 + $0x1b0] sm:$0xff]
    %v2426 = vld [vmem:[#allocation10 + $0x1b8] sm:$0xff]
    %v2427 = vld [vmem:[#allocation10 + $0x1c0] sm:$0xff]
    %v2428 = vld [vmem:[#allocation10 + $0x1c8] sm:$0xff]
    %v2429 = vld [vmem:[#allocation10 + $0x1d0] sm:$0xff]
    %v2430 = vld [vmem:[#allocation10 + $0x1d8] sm:$0xff]
    %v2431 = vld [vmem:[#allocation10 + $0x1e0] sm:$0xff]
    %v2432 = vld [vmem:[#allocation10 + $0x1e8] sm:$0xff]
    %v2433 = vld [vmem:[#allocation10 + $0x1f0] sm:$0xff]
    %v2434 = vld [vmem:[#allocation10 + $0x1f8] sm:$0xff]
    %v2435 = vld [vmem:[#allocation10 + $0x200] sm:$0xff]
    %v2436 = vld [vmem:[#allocation10 + $0x208] sm:$0xff]
    %v2437 = vld [vmem:[#allocation10 + $0x210] sm:$0xff]
    %v2438 = vld [vmem:[#allocation10 + $0x218] sm:$0xff]
    %v2439 = vld [vmem:[#allocation10 + $0x220] sm:$0xff]
    %v2440 = vld [vmem:[#allocation10 + $0x228] sm:$0xff]
    %v2441 = vld [vmem:[#allocation10 + $0x230] sm:$0xff]
    %v2442 = vld [vmem:[#allocation10 + $0x238] sm:$0xff]
    %v2443 = vld [vmem:[#allocation10 + $0x240] sm:$0xff]
    %v2444 = vld [vmem:[#allocation10 + $0x248] sm:$0xff]
    %v2445 = vld [vmem:[#allocation10 + $0x250] sm:$0xff]
    %v2446 = vld [vmem:[#allocation10 + $0x258] sm:$0xff]
    %v2447 = vld [vmem:[#allocation10 + $0x260] sm:$0xff]
    %v2448 = vld [vmem:[#allocation10 + $0x268] sm:$0xff]
    %v2449 = vld [vmem:[#allocation10 + $0x270] sm:$0xff]
    %v2450 = vld [vmem:[#allocation10 + $0x278] sm:$0xff]
    %v2451 = vld [vmem:[#allocation10 + $0x280] sm:$0xff]
    %v2452 = vld [vmem:[#allocation10 + $0x288] sm:$0xff]
    %v2453 = vld [vmem:[#allocation10 + $0x290] sm:$0xff]
    %v2454 = vld [vmem:[#allocation10 + $0x298] sm:$0xff]
    %v2455 = vld [vmem:[#allocation10 + $0x2a0] sm:$0xff]
    %v2456 = vld [vmem:[#allocation10 + $0x2a8] sm:$0xff]
    %v2457 = vld [vmem:[#allocation10 + $0x2b0] sm:$0xff]
    %v2458 = vld [vmem:[#allocation10 + $0x2b8] sm:$0xff]
    %v2459 = vld [vmem:[#allocation10 + $0x2c0] sm:$0xff]
    %v2460 = vld [vmem:[#allocation10 + $0x2c8] sm:$0xff]
    %v2461 = vld [vmem:[#allocation10 + $0x2d0] sm:$0xff]
    %v2462 = vld [vmem:[#allocation10 + $0x2d8] sm:$0xff]
    %v2463 = vld [vmem:[#allocation10 + $0x2e0] sm:$0xff]
    %v2464 = vld [vmem:[#allocation10 + $0x2e8] sm:$0xff]
    %v2465 = vld [vmem:[#allocation10 + $0x2f0] sm:$0xff]
    %v2466 = vld [vmem:[#allocation10 + $0x2f8] sm:$0xff]
    %v2467 = vld [vmem:[#allocation10 + $0x300] sm:$0xff]
    %v2468 = vld [vmem:[#allocation10 + $0x308] sm:$0xff]
    %v2469 = vld [vmem:[#allocation10 + $0x310] sm:$0xff]
    %v2470 = vld [vmem:[#allocation10 + $0x318] sm:$0xff]
    %v2471 = vld [vmem:[#allocation10 + $0x320] sm:$0xff]
    %v2472 = vld [vmem:[#allocation10 + $0x328] sm:$0xff]
    %v2473 = vld [vmem:[#allocation10 + $0x330] sm:$0xff]
    %v2474 = vld [vmem:[#allocation10 + $0x338] sm:$0xff]
    %v2475 = vld [vmem:[#allocation10 + $0x340] sm:$0xff]
    %v2476 = vld [vmem:[#allocation10 + $0x348] sm:$0xff]
    %v2477 = vld [vmem:[#allocation10 + $0x350] sm:$0xff]
    %v2478 = vld [vmem:[#allocation10 + $0x358] sm:$0xff]
    %v2479 = vld [vmem:[#allocation10 + $0x360] sm:$0xff]
    %v2480 = vld [vmem:[#allocation10 + $0x368] sm:$0xff]
    %v2481 = vld [vmem:[#allocation10 + $0x370] sm:$0xff]
    %v2482 = vld [vmem:[#allocation10 + $0x378] sm:$0xff]
    %v2483 = vld [vmem:[#allocation10 + $0x380] sm:$0xff]
    %v2484 = vld [vmem:[#allocation10 + $0x388] sm:$0xff]
    %v2485 = vld [vmem:[#allocation10 + $0x390] sm:$0xff]
    %v2486 = vld [vmem:[#allocation10 + $0x398] sm:$0xff]
    %v2487 = vld [vmem:[#allocation10 + $0x3a0] sm:$0xff]
    %v2488 = vld [vmem:[#allocation10 + $0x3a8] sm:$0xff]
    %v2489 = vld [vmem:[#allocation10 + $0x3b0] sm:$0xff]
    %v2490 = vld [vmem:[#allocation10 + $0x3b8] sm:$0xff]
    %v2491 = vld [vmem:[#allocation10 + $0x3c0] sm:$0xff]
    %v2492 = vld [vmem:[#allocation10 + $0x3c8] sm:$0xff]
    %v2493 = vld [vmem:[#allocation10 + $0x3d0] sm:$0xff]
    %v2494 = vld [vmem:[#allocation10 + $0x3d8] sm:$0xff]
    %v2495 = vld [vmem:[#allocation10 + $0x3e0] sm:$0xff]
    %v2496 = vld [vmem:[#allocation10 + $0x3e8] sm:$0xff]
    %v2497 = vld [vmem:[#allocation10 + $0x3f0] sm:$0xff]
    %v2498 = vld [vmem:[#allocation10 + $0x3f8] sm:$0xff]
    %v2499 = vld [vmem:[%s8] sm:$0xf]
    %v2501 = vlaneseq
    %v2502 = vshrl.u32 %v2501, 7
    %v2503 = vsub.s32 0, %v2502
    %v2504 = vrot.slane %v2499, %v2503
    %v2505 = vlaneseq
    %v2506 = vshrl.u32 %v2505, 7
    %v2507 = vsub.s32 1, %v2506
    %v2508 = vrot.slane %v2499, %v2507
    %v2509 = vlaneseq
    %v2510 = vshrl.u32 %v2509, 7
    %v2511 = vsub.s32 2, %v2510
    %v2512 = vrot.slane %v2499, %v2511
    %v2513 = vlaneseq
    %v2514 = vshrl.u32 %v2513, 7
    %v2515 = vsub.s32 3, %v2514
    %v2516 = vrot.slane %v2499, %v2515
    %v2649 = vunpack.c.l.b16 %v2371
    %v2650 = vunpack.c.h.b16 %v2371
    %v2651 = vunpack.c.l.b16 %v2372
    %v2652 = vunpack.c.h.b16 %v2372
    %v2653 = vunpack.c.l.b16 %v2373
    %v2654 = vunpack.c.h.b16 %v2373
    %v2655 = vunpack.c.l.b16 %v2374
    %v2656 = vunpack.c.h.b16 %v2374
    %v2657 = vunpack.c.l.b16 %v2375
    %v2658 = vunpack.c.h.b16 %v2375
    %v2659 = vunpack.c.l.b16 %v2376
    %v2660 = vunpack.c.h.b16 %v2376
    %v2661 = vunpack.c.l.b16 %v2377
    %v2662 = vunpack.c.h.b16 %v2377
    %v2663 = vunpack.c.l.b16 %v2378
    %v2664 = vunpack.c.h.b16 %v2378
    %v2665 = vunpack.c.l.b16 %v2379
    %v2666 = vunpack.c.h.b16 %v2379
    %v2667 = vunpack.c.l.b16 %v2380
    %v2668 = vunpack.c.h.b16 %v2380
    %v2669 = vunpack.c.l.b16 %v2381
    %v2670 = vunpack.c.h.b16 %v2381
    %v2671 = vunpack.c.l.b16 %v2382
    %v2672 = vunpack.c.h.b16 %v2382
    %v2673 = vunpack.c.l.b16 %v2383
    %v2674 = vunpack.c.h.b16 %v2383
    %v2675 = vunpack.c.l.b16 %v2384
    %v2676 = vunpack.c.h.b16 %v2384
    %v2677 = vunpack.c.l.b16 %v2385
    %v2678 = vunpack.c.h.b16 %v2385
    %v2679 = vunpack.c.l.b16 %v2386
    %v2680 = vunpack.c.h.b16 %v2386
    %v2681 = vunpack.c.l.b16 %v2387
    %v2682 = vunpack.c.h.b16 %v2387
    %v2683 = vunpack.c.l.b16 %v2388
    %v2684 = vunpack.c.h.b16 %v2388
    %v2685 = vunpack.c.l.b16 %v2389
    %v2686 = vunpack.c.h.b16 %v2389
    %v2687 = vunpack.c.l.b16 %v2390
    %v2688 = vunpack.c.h.b16 %v2390
    %v2689 = vunpack.c.l.b16 %v2391
    %v2690 = vunpack.c.h.b16 %v2391
    %v2691 = vunpack.c.l.b16 %v2392
    %v2692 = vunpack.c.h.b16 %v2392
    %v2693 = vunpack.c.l.b16 %v2393
    %v2694 = vunpack.c.h.b16 %v2393
    %v2695 = vunpack.c.l.b16 %v2394
    %v2696 = vunpack.c.h.b16 %v2394
    %v2697 = vunpack.c.l.b16 %v2395
    %v2698 = vunpack.c.h.b16 %v2395
    %v2699 = vunpack.c.l.b16 %v2396
    %v2700 = vunpack.c.h.b16 %v2396
    %v2701 = vunpack.c.l.b16 %v2397
    %v2702 = vunpack.c.h.b16 %v2397
    %v2703 = vunpack.c.l.b16 %v2398
    %v2704 = vunpack.c.h.b16 %v2398
    %v2705 = vunpack.c.l.b16 %v2399
    %v2706 = vunpack.c.h.b16 %v2399
    %v2707 = vunpack.c.l.b16 %v2400
    %v2708 = vunpack.c.h.b16 %v2400
    %v2709 = vunpack.c.l.b16 %v2401
    %v2710 = vunpack.c.h.b16 %v2401
    %v2711 = vunpack.c.l.b16 %v2402
    %v2712 = vunpack.c.h.b16 %v2402
    %v2713 = vunpack.c.l.b16 %v2403
    %v2714 = vunpack.c.h.b16 %v2403
    %v2715 = vunpack.c.l.b16 %v2404
    %v2716 = vunpack.c.h.b16 %v2404
    %v2717 = vunpack.c.l.b16 %v2405
    %v2718 = vunpack.c.h.b16 %v2405
    %v2719 = vunpack.c.l.b16 %v2406
    %v2720 = vunpack.c.h.b16 %v2406
    %v2721 = vunpack.c.l.b16 %v2407
    %v2722 = vunpack.c.h.b16 %v2407
    %v2723 = vunpack.c.l.b16 %v2408
    %v2724 = vunpack.c.h.b16 %v2408
    %v2725 = vunpack.c.l.b16 %v2409
    %v2726 = vunpack.c.h.b16 %v2409
    %v2727 = vunpack.c.l.b16 %v2410
    %v2728 = vunpack.c.h.b16 %v2410
    %v2729 = vunpack.c.l.b16 %v2411
    %v2730 = vunpack.c.h.b16 %v2411
    %v2731 = vunpack.c.l.b16 %v2412
    %v2732 = vunpack.c.h.b16 %v2412
    %v2733 = vunpack.c.l.b16 %v2413
    %v2734 = vunpack.c.h.b16 %v2413
    %v2735 = vunpack.c.l.b16 %v2414
    %v2736 = vunpack.c.h.b16 %v2414
    %v2737 = vunpack.c.l.b16 %v2415
    %v2738 = vunpack.c.h.b16 %v2415
    %v2739 = vunpack.c.l.b16 %v2416
    %v2740 = vunpack.c.h.b16 %v2416
    %v2741 = vunpack.c.l.b16 %v2417
    %v2742 = vunpack.c.h.b16 %v2417
    %v2743 = vunpack.c.l.b16 %v2418
    %v2744 = vunpack.c.h.b16 %v2418
    %v2745 = vunpack.c.l.b16 %v2419
    %v2746 = vunpack.c.h.b16 %v2419
    %v2747 = vunpack.c.l.b16 %v2420
    %v2748 = vunpack.c.h.b16 %v2420
    %v2749 = vunpack.c.l.b16 %v2421
    %v2750 = vunpack.c.h.b16 %v2421
    %v2751 = vunpack.c.l.b16 %v2422
    %v2752 = vunpack.c.h.b16 %v2422
    %v2753 = vunpack.c.l.b16 %v2423
    %v2754 = vunpack.c.h.b16 %v2423
    %v2755 = vunpack.c.l.b16 %v2424
    %v2756 = vunpack.c.h.b16 %v2424
    %v2757 = vunpack.c.l.b16 %v2425
    %v2758 = vunpack.c.h.b16 %v2425
    %v2759 = vunpack.c.l.b16 %v2426
    %v2760 = vunpack.c.h.b16 %v2426
    %v2761 = vunpack.c.l.b16 %v2427
    %v2762 = vunpack.c.h.b16 %v2427
    %v2763 = vunpack.c.l.b16 %v2428
    %v2764 = vunpack.c.h.b16 %v2428
    %v2765 = vunpack.c.l.b16 %v2429
    %v2766 = vunpack.c.h.b16 %v2429
    %v2767 = vunpack.c.l.b16 %v2430
    %v2768 = vunpack.c.h.b16 %v2430
    %v2769 = vunpack.c.l.b16 %v2431
    %v2770 = vunpack.c.h.b16 %v2431
    %v2771 = vunpack.c.l.b16 %v2432
    %v2772 = vunpack.c.h.b16 %v2432
    %v2773 = vunpack.c.l.b16 %v2433
    %v2774 = vunpack.c.h.b16 %v2433
    %v2775 = vunpack.c.l.b16 %v2434
    %v2776 = vunpack.c.h.b16 %v2434
    %v2777 = vunpack.c.l.b16 %v2435
    %v2778 = vunpack.c.h.b16 %v2435
    %v2779 = vunpack.c.l.b16 %v2436
    %v2780 = vunpack.c.h.b16 %v2436
    %v2781 = vunpack.c.l.b16 %v2437
    %v2782 = vunpack.c.h.b16 %v2437
    %v2783 = vunpack.c.l.b16 %v2438
    %v2784 = vunpack.c.h.b16 %v2438
    %v2785 = vunpack.c.l.b16 %v2439
    %v2786 = vunpack.c.h.b16 %v2439
    %v2787 = vunpack.c.l.b16 %v2440
    %v2788 = vunpack.c.h.b16 %v2440
    %v2789 = vunpack.c.l.b16 %v2441
    %v2790 = vunpack.c.h.b16 %v2441
    %v2791 = vunpack.c.l.b16 %v2442
    %v2792 = vunpack.c.h.b16 %v2442
    %v2793 = vunpack.c.l.b16 %v2443
    %v2794 = vunpack.c.h.b16 %v2443
    %v2795 = vunpack.c.l.b16 %v2444
    %v2796 = vunpack.c.h.b16 %v2444
    %v2797 = vunpack.c.l.b16 %v2445
    %v2798 = vunpack.c.h.b16 %v2445
    %v2799 = vunpack.c.l.b16 %v2446
    %v2800 = vunpack.c.h.b16 %v2446
    %v2801 = vunpack.c.l.b16 %v2447
    %v2802 = vunpack.c.h.b16 %v2447
    %v2803 = vunpack.c.l.b16 %v2448
    %v2804 = vunpack.c.h.b16 %v2448
    %v2805 = vunpack.c.l.b16 %v2449
    %v2806 = vunpack.c.h.b16 %v2449
    %v2807 = vunpack.c.l.b16 %v2450
    %v2808 = vunpack.c.h.b16 %v2450
    %v2809 = vunpack.c.l.b16 %v2451
    %v2810 = vunpack.c.h.b16 %v2451
    %v2811 = vunpack.c.l.b16 %v2452
    %v2812 = vunpack.c.h.b16 %v2452
    %v2813 = vunpack.c.l.b16 %v2453
    %v2814 = vunpack.c.h.b16 %v2453
    %v2815 = vunpack.c.l.b16 %v2454
    %v2816 = vunpack.c.h.b16 %v2454
    %v2817 = vunpack.c.l.b16 %v2455
    %v2818 = vunpack.c.h.b16 %v2455
    %v2819 = vunpack.c.l.b16 %v2456
    %v2820 = vunpack.c.h.b16 %v2456
    %v2821 = vunpack.c.l.b16 %v2457
    %v2822 = vunpack.c.h.b16 %v2457
    %v2823 = vunpack.c.l.b16 %v2458
    %v2824 = vunpack.c.h.b16 %v2458
    %v2825 = vunpack.c.l.b16 %v2459
    %v2826 = vunpack.c.h.b16 %v2459
    %v2827 = vunpack.c.l.b16 %v2460
    %v2828 = vunpack.c.h.b16 %v2460
    %v2829 = vunpack.c.l.b16 %v2461
    %v2830 = vunpack.c.h.b16 %v2461
    %v2831 = vunpack.c.l.b16 %v2462
    %v2832 = vunpack.c.h.b16 %v2462
    %v2833 = vunpack.c.l.b16 %v2463
    %v2834 = vunpack.c.h.b16 %v2463
    %v2835 = vunpack.c.l.b16 %v2464
    %v2836 = vunpack.c.h.b16 %v2464
    %v2837 = vunpack.c.l.b16 %v2465
    %v2838 = vunpack.c.h.b16 %v2465
    %v2839 = vunpack.c.l.b16 %v2466
    %v2840 = vunpack.c.h.b16 %v2466
    %v2841 = vunpack.c.l.b16 %v2467
    %v2842 = vunpack.c.h.b16 %v2467
    %v2843 = vunpack.c.l.b16 %v2468
    %v2844 = vunpack.c.h.b16 %v2468
    %v2845 = vunpack.c.l.b16 %v2469
    %v2846 = vunpack.c.h.b16 %v2469
    %v2847 = vunpack.c.l.b16 %v2470
    %v2848 = vunpack.c.h.b16 %v2470
    %v2849 = vunpack.c.l.b16 %v2471
    %v2850 = vunpack.c.h.b16 %v2471
    %v2851 = vunpack.c.l.b16 %v2472
    %v2852 = vunpack.c.h.b16 %v2472
    %v2853 = vunpack.c.l.b16 %v2473
    %v2854 = vunpack.c.h.b16 %v2473
    %v2855 = vunpack.c.l.b16 %v2474
    %v2856 = vunpack.c.h.b16 %v2474
    %v2857 = vunpack.c.l.b16 %v2475
    %v2858 = vunpack.c.h.b16 %v2475
    %v2859 = vunpack.c.l.b16 %v2476
    %v2860 = vunpack.c.h.b16 %v2476
    %v2861 = vunpack.c.l.b16 %v2477
    %v2862 = vunpack.c.h.b16 %v2477
    %v2863 = vunpack.c.l.b16 %v2478
    %v2864 = vunpack.c.h.b16 %v2478
    %v2865 = vunpack.c.l.b16 %v2479
    %v2866 = vunpack.c.h.b16 %v2479
    %v2867 = vunpack.c.l.b16 %v2480
    %v2868 = vunpack.c.h.b16 %v2480
    %v2869 = vunpack.c.l.b16 %v2481
    %v2870 = vunpack.c.h.b16 %v2481
    %v2871 = vunpack.c.l.b16 %v2482
    %v2872 = vunpack.c.h.b16 %v2482
    %v2873 = vunpack.c.l.b16 %v2483
    %v2874 = vunpack.c.h.b16 %v2483
    %v2875 = vunpack.c.l.b16 %v2484
    %v2876 = vunpack.c.h.b16 %v2484
    %v2877 = vunpack.c.l.b16 %v2485
    %v2878 = vunpack.c.h.b16 %v2485
    %v2879 = vunpack.c.l.b16 %v2486
    %v2880 = vunpack.c.h.b16 %v2486
    %v2881 = vunpack.c.l.b16 %v2487
    %v2882 = vunpack.c.h.b16 %v2487
    %v2883 = vunpack.c.l.b16 %v2488
    %v2884 = vunpack.c.h.b16 %v2488
    %v2885 = vunpack.c.l.b16 %v2489
    %v2886 = vunpack.c.h.b16 %v2489
    %v2887 = vunpack.c.l.b16 %v2490
    %v2888 = vunpack.c.h.b16 %v2490
    %v2889 = vunpack.c.l.b16 %v2491
    %v2890 = vunpack.c.h.b16 %v2491
    %v2891 = vunpack.c.l.b16 %v2492
    %v2892 = vunpack.c.h.b16 %v2492
    %v2893 = vunpack.c.l.b16 %v2493
    %v2894 = vunpack.c.h.b16 %v2493
    %v2895 = vunpack.c.l.b16 %v2494
    %v2896 = vunpack.c.h.b16 %v2494
    %v2897 = vunpack.c.l.b16 %v2495
    %v2898 = vunpack.c.h.b16 %v2495
    %v2899 = vunpack.c.l.b16 %v2496
    %v2900 = vunpack.c.h.b16 %v2496
    %v2901 = vunpack.c.l.b16 %v2497
    %v2902 = vunpack.c.h.b16 %v2497
    %v2903 = vunpack.c.l.b16 %v2498
    %v2904 = vunpack.c.h.b16 %v2498
    %v2905 = vpack.c.b16 %v2653, %v2649
    %v2906 = vpack.c.b16 %v2654, %v2650
    %v2907 = vpack.c.b16 %v2655, %v2651
    %v2908 = vpack.c.b16 %v2656, %v2652
    %v2909 = vpack.c.b16 %v2661, %v2657
    %v2910 = vpack.c.b16 %v2662, %v2658
    %v2911 = vpack.c.b16 %v2663, %v2659
    %v2912 = vpack.c.b16 %v2664, %v2660
    %v2913 = vpack.c.b16 %v2669, %v2665
    %v2914 = vpack.c.b16 %v2670, %v2666
    %v2915 = vpack.c.b16 %v2671, %v2667
    %v2916 = vpack.c.b16 %v2672, %v2668
    %v2917 = vpack.c.b16 %v2677, %v2673
    %v2918 = vpack.c.b16 %v2678, %v2674
    %v2919 = vpack.c.b16 %v2679, %v2675
    %v2920 = vpack.c.b16 %v2680, %v2676
    %v2921 = vpack.c.b16 %v2685, %v2681
    %v2922 = vpack.c.b16 %v2686, %v2682
    %v2923 = vpack.c.b16 %v2687, %v2683
    %v2924 = vpack.c.b16 %v2688, %v2684
    %v2925 = vpack.c.b16 %v2693, %v2689
    %v2926 = vpack.c.b16 %v2694, %v2690
    %v2927 = vpack.c.b16 %v2695, %v2691
    %v2928 = vpack.c.b16 %v2696, %v2692
    %v2929 = vpack.c.b16 %v2701, %v2697
    %v2930 = vpack.c.b16 %v2702, %v2698
    %v2931 = vpack.c.b16 %v2703, %v2699
    %v2932 = vpack.c.b16 %v2704, %v2700
    %v2933 = vpack.c.b16 %v2709, %v2705
    %v2934 = vpack.c.b16 %v2710, %v2706
    %v2935 = vpack.c.b16 %v2711, %v2707
    %v2936 = vpack.c.b16 %v2712, %v2708
    %v2937 = vpack.c.b16 %v2717, %v2713
    %v2938 = vpack.c.b16 %v2718, %v2714
    %v2939 = vpack.c.b16 %v2719, %v2715
    %v2940 = vpack.c.b16 %v2720, %v2716
    %v2941 = vpack.c.b16 %v2725, %v2721
    %v2942 = vpack.c.b16 %v2726, %v2722
    %v2943 = vpack.c.b16 %v2727, %v2723
    %v2944 = vpack.c.b16 %v2728, %v2724
    %v2945 = vpack.c.b16 %v2733, %v2729
    %v2946 = vpack.c.b16 %v2734, %v2730
    %v2947 = vpack.c.b16 %v2735, %v2731
    %v2948 = vpack.c.b16 %v2736, %v2732
    %v2949 = vpack.c.b16 %v2741, %v2737
    %v2950 = vpack.c.b16 %v2742, %v2738
    %v2951 = vpack.c.b16 %v2743, %v2739
    %v2952 = vpack.c.b16 %v2744, %v2740
    %v2953 = vpack.c.b16 %v2749, %v2745
    %v2954 = vpack.c.b16 %v2750, %v2746
    %v2955 = vpack.c.b16 %v2751, %v2747
    %v2956 = vpack.c.b16 %v2752, %v2748
    %v2957 = vpack.c.b16 %v2757, %v2753
    %v2958 = vpack.c.b16 %v2758, %v2754
    %v2959 = vpack.c.b16 %v2759, %v2755
    %v2960 = vpack.c.b16 %v2760, %v2756
    %v2961 = vpack.c.b16 %v2765, %v2761
    %v2962 = vpack.c.b16 %v2766, %v2762
    %v2963 = vpack.c.b16 %v2767, %v2763
    %v2964 = vpack.c.b16 %v2768, %v2764
    %v2965 = vpack.c.b16 %v2773, %v2769
    %v2966 = vpack.c.b16 %v2774, %v2770
    %v2967 = vpack.c.b16 %v2775, %v2771
    %v2968 = vpack.c.b16 %v2776, %v2772
    %v2969 = vpack.c.b16 %v2781, %v2777
    %v2970 = vpack.c.b16 %v2782, %v2778
    %v2971 = vpack.c.b16 %v2783, %v2779
    %v2972 = vpack.c.b16 %v2784, %v2780
    %v2973 = vpack.c.b16 %v2789, %v2785
    %v2974 = vpack.c.b16 %v2790, %v2786
    %v2975 = vpack.c.b16 %v2791, %v2787
    %v2976 = vpack.c.b16 %v2792, %v2788
    %v2977 = vpack.c.b16 %v2797, %v2793
    %v2978 = vpack.c.b16 %v2798, %v2794
    %v2979 = vpack.c.b16 %v2799, %v2795
    %v2980 = vpack.c.b16 %v2800, %v2796
    %v2981 = vpack.c.b16 %v2805, %v2801
    %v2982 = vpack.c.b16 %v2806, %v2802
    %v2983 = vpack.c.b16 %v2807, %v2803
    %v2984 = vpack.c.b16 %v2808, %v2804
    %v2985 = vpack.c.b16 %v2813, %v2809
    %v2986 = vpack.c.b16 %v2814, %v2810
    %v2987 = vpack.c.b16 %v2815, %v2811
    %v2988 = vpack.c.b16 %v2816, %v2812
    %v2989 = vpack.c.b16 %v2821, %v2817
    %v2990 = vpack.c.b16 %v2822, %v2818
    %v2991 = vpack.c.b16 %v2823, %v2819
    %v2992 = vpack.c.b16 %v2824, %v2820
    %v2993 = vpack.c.b16 %v2829, %v2825
    %v2994 = vpack.c.b16 %v2830, %v2826
    %v2995 = vpack.c.b16 %v2831, %v2827
    %v2996 = vpack.c.b16 %v2832, %v2828
    %v2997 = vpack.c.b16 %v2837, %v2833
    %v2998 = vpack.c.b16 %v2838, %v2834
    %v2999 = vpack.c.b16 %v2839, %v2835
    %v3000 = vpack.c.b16 %v2840, %v2836
    %v3001 = vpack.c.b16 %v2845, %v2841
    %v3002 = vpack.c.b16 %v2846, %v2842
    %v3003 = vpack.c.b16 %v2847, %v2843
    %v3004 = vpack.c.b16 %v2848, %v2844
    %v3005 = vpack.c.b16 %v2853, %v2849
    %v3006 = vpack.c.b16 %v2854, %v2850
    %v3007 = vpack.c.b16 %v2855, %v2851
    %v3008 = vpack.c.b16 %v2856, %v2852
    %v3009 = vpack.c.b16 %v2861, %v2857
    %v3010 = vpack.c.b16 %v2862, %v2858
    %v3011 = vpack.c.b16 %v2863, %v2859
    %v3012 = vpack.c.b16 %v2864, %v2860
    %v3013 = vpack.c.b16 %v2869, %v2865
    %v3014 = vpack.c.b16 %v2870, %v2866
    %v3015 = vpack.c.b16 %v2871, %v2867
    %v3016 = vpack.c.b16 %v2872, %v2868
    %v3017 = vpack.c.b16 %v2877, %v2873
    %v3018 = vpack.c.b16 %v2878, %v2874
    %v3019 = vpack.c.b16 %v2879, %v2875
    %v3020 = vpack.c.b16 %v2880, %v2876
    %v3021 = vpack.c.b16 %v2885, %v2881
    %v3022 = vpack.c.b16 %v2886, %v2882
    %v3023 = vpack.c.b16 %v2887, %v2883
    %v3024 = vpack.c.b16 %v2888, %v2884
    %v3025 = vpack.c.b16 %v2893, %v2889
    %v3026 = vpack.c.b16 %v2894, %v2890
    %v3027 = vpack.c.b16 %v2895, %v2891
    %v3028 = vpack.c.b16 %v2896, %v2892
    %v3029 = vpack.c.b16 %v2901, %v2897
    %v3030 = vpack.c.b16 %v2902, %v2898
    %v3031 = vpack.c.b16 %v2903, %v2899
    %v3032 = vpack.c.b16 %v2904, %v2900
    %3161 = vmatprep.subr.bf16.mxu0 %v2906
    %3162 = vmatpush1.bf16.msra.mxu0 %v2905
    %3163 = vmatprep.subr.bf16.mxu0 %v2910
    %3164 = vmatpush1.bf16.msra.mxu0 %v2909
    %3165 = vmatprep.subr.bf16.mxu0 %v2914
    %3166 = vmatpush1.bf16.msra.mxu0 %v2913
    %3167 = vmatprep.subr.bf16.mxu0 %v2918
    %3168 = vmatpush1.bf16.msra.mxu0 %v2917
    %3169 = vmatprep.subr.bf16.mxu0 %v2922
    %3170 = vmatpush1.bf16.msra.mxu0 %v2921
    %3171 = vmatprep.subr.bf16.mxu0 %v2926
    %3172 = vmatpush1.bf16.msra.mxu0 %v2925
    %3173 = vmatprep.subr.bf16.mxu0 %v2930
    %3174 = vmatpush1.bf16.msra.mxu0 %v2929
    %3175 = vmatprep.subr.bf16.mxu0 %v2934
    %3176 = vmatpush1.bf16.msra.mxu0 %v2933
    %3177 = vmatprep.subr.bf16.mxu0 %v2938
    %3178 = vmatpush1.bf16.msra.mxu0 %v2937
    %3179 = vmatprep.subr.bf16.mxu0 %v2942
    %3180 = vmatpush1.bf16.msra.mxu0 %v2941
    %3181 = vmatprep.subr.bf16.mxu0 %v2946
    %3182 = vmatpush1.bf16.msra.mxu0 %v2945
    %3183 = vmatprep.subr.bf16.mxu0 %v2950
    %3184 = vmatpush1.bf16.msra.mxu0 %v2949
    %3185 = vmatprep.subr.bf16.mxu0 %v2954
    %3186 = vmatpush1.bf16.msra.mxu0 %v2953
    %3187 = vmatprep.subr.bf16.mxu0 %v2958
    %3188 = vmatpush1.bf16.msra.mxu0 %v2957
    %3189 = vmatprep.subr.bf16.mxu0 %v2962
    %3190 = vmatpush1.bf16.msra.mxu0 %v2961
    %3191 = vmatprep.subr.bf16.mxu0 %v2966
    %3192 = vmatpush1.bf16.msra.mxu0 %v2965
    %3193 = vmatprep.mubr.bf16.mxu0 %v2368
    %3194 = vmatmul.mubr.bf16.gmra.mrb[0].mxu0 %v2367
    %v3195 = vpop.f32.mrb[0].mxu0
    %v3196 = vadd.f32 %v2504, %v3195
    %v3197 = vpop.f32.mrb[0].mxu0
    %v3198 = vadd.f32 %v2508, %v3197
    %v3199 = vpop.f32.mrb[0].mxu0
    %v3200 = vadd.f32 %v2504, %v3199
    %v3201 = vpop.f32.mrb[0].mxu0
    %v3202 = vadd.f32 %v2508, %v3201
    %3203 = vdwg.mxu0
    %3204 = vmatprep.subr.bf16.mxu0 %v2970
    %3205 = vmatpush1.bf16.msra.mxu0 %v2969
    %3206 = vmatprep.subr.bf16.mxu0 %v2974
    %3207 = vmatpush1.bf16.msra.mxu0 %v2973
    %3208 = vmatprep.subr.bf16.mxu0 %v2978
    %3209 = vmatpush1.bf16.msra.mxu0 %v2977
    %3210 = vmatprep.subr.bf16.mxu0 %v2982
    %3211 = vmatpush1.bf16.msra.mxu0 %v2981
    %3212 = vmatprep.subr.bf16.mxu0 %v2986
    %3213 = vmatpush1.bf16.msra.mxu0 %v2985
    %3214 = vmatprep.subr.bf16.mxu0 %v2990
    %3215 = vmatpush1.bf16.msra.mxu0 %v2989
    %3216 = vmatprep.subr.bf16.mxu0 %v2994
    %3217 = vmatpush1.bf16.msra.mxu0 %v2993
    %3218 = vmatprep.subr.bf16.mxu0 %v2998
    %3219 = vmatpush1.bf16.msra.mxu0 %v2997
    %3220 = vmatprep.subr.bf16.mxu0 %v3002
    %3221 = vmatpush1.bf16.msra.mxu0 %v3001
    %3222 = vmatprep.subr.bf16.mxu0 %v3006
    %3223 = vmatpush1.bf16.msra.mxu0 %v3005
    %3224 = vmatprep.subr.bf16.mxu0 %v3010
    %3225 = vmatpush1.bf16.msra.mxu0 %v3009
    %3226 = vmatprep.subr.bf16.mxu0 %v3014
    %3227 = vmatpush1.bf16.msra.mxu0 %v3013
    %3228 = vmatprep.subr.bf16.mxu0 %v3018
    %3229 = vmatpush1.bf16.msra.mxu0 %v3017
    %3230 = vmatprep.subr.bf16.mxu0 %v3022
    %3231 = vmatpush1.bf16.msra.mxu0 %v3021
    %3232 = vmatprep.subr.bf16.mxu0 %v3026
    %3233 = vmatpush1.bf16.msra.mxu0 %v3025
    %3234 = vmatprep.subr.bf16.mxu0 %v3030
    %3235 = vmatpush1.bf16.msra.mxu0 %v3029
    %3236 = vmatprep.mubr.bf16.mxu0 %v2370
    %3237 = vmatmul.mubr.bf16.gmra.mrb[0].mxu0 %v2369
    %v3238 = vpop.f32.mrb[0].mxu0
    %v3239 = vadd.f32 %v3196, %v3238
    %v3240 = vpop.f32.mrb[0].mxu0
    %v3241 = vadd.f32 %v3198, %v3240
    %v3242 = vpop.f32.mrb[0].mxu0
    %v3243 = vadd.f32 %v3200, %v3242
    %v3244 = vpop.f32.mrb[0].mxu0
    %v3245 = vadd.f32 %v3202, %v3244
    %3246 = vdwg.mxu0
    %3247 = vmatprep.subr.bf16.mxu0 %v2908
    %3248 = vmatpush1.bf16.msra.mxu0 %v2907
    %3249 = vmatprep.subr.bf16.mxu0 %v2912
    %3250 = vmatpush1.bf16.msra.mxu0 %v2911
    %3251 = vmatprep.subr.bf16.mxu0 %v2916
    %3252 = vmatpush1.bf16.msra.mxu0 %v2915
    %3253 = vmatprep.subr.bf16.mxu0 %v2920
    %3254 = vmatpush1.bf16.msra.mxu0 %v2919
    %3255 = vmatprep.subr.bf16.mxu0 %v2924
    %3256 = vmatpush1.bf16.msra.mxu0 %v2923
    %3257 = vmatprep.subr.bf16.mxu0 %v2928
    %3258 = vmatpush1.bf16.msra.mxu0 %v2927
    %3259 = vmatprep.subr.bf16.mxu0 %v2932
    %3260 = vmatpush1.bf16.msra.mxu0 %v2931
    %3261 = vmatprep.subr.bf16.mxu0 %v2936
    %3262 = vmatpush1.bf16.msra.mxu0 %v2935
    %3263 = vmatprep.subr.bf16.mxu0 %v2940
    %3264 = vmatpush1.bf16.msra.mxu0 %v2939
    %3265 = vmatprep.subr.bf16.mxu0 %v2944
    %3266 = vmatpush1.bf16.msra.mxu0 %v2943
    %3267 = vmatprep.subr.bf16.mxu0 %v2948
    %3268 = vmatpush1.bf16.msra.mxu0 %v2947
    %3269 = vmatprep.subr.bf16.mxu0 %v2952
    %3270 = vmatpush1.bf16.msra.mxu0 %v2951
    %3271 = vmatprep.subr.bf16.mxu0 %v2956
    %3272 = vmatpush1.bf16.msra.mxu0 %v2955
    %3273 = vmatprep.subr.bf16.mxu0 %v2960
    %3274 = vmatpush1.bf16.msra.mxu0 %v2959
    %3275 = vmatprep.subr.bf16.mxu0 %v2964
    %3276 = vmatpush1.bf16.msra.mxu0 %v2963
    %3277 = vmatprep.subr.bf16.mxu0 %v2968
    %3278 = vmatpush1.bf16.msra.mxu0 %v2967
    %3279 = vmatprep.mubr.bf16.mxu0 %v2368
    %3280 = vmatmul.mubr.bf16.gmra.mrb[0].mxu0 %v2367
    %v3281 = vpop.f32.mrb[0].mxu0
    %v3282 = vadd.f32 %v2512, %v3281
    %v3283 = vpop.f32.mrb[0].mxu0
    %v3284 = vadd.f32 %v2516, %v3283
    %v3285 = vpop.f32.mrb[0].mxu0
    %v3286 = vadd.f32 %v2512, %v3285
    %v3287 = vpop.f32.mrb[0].mxu0
    %v3288 = vadd.f32 %v2516, %v3287
    %3289 = vdwg.mxu0
    %3290 = vmatprep.subr.bf16.mxu0 %v2972
    %3291 = vmatpush1.bf16.msra.mxu0 %v2971
    %3292 = vmatprep.subr.bf16.mxu0 %v2976
    %3293 = vmatpush1.bf16.msra.mxu0 %v2975
    %3294 = vmatprep.subr.bf16.mxu0 %v2980
    %3295 = vmatpush1.bf16.msra.mxu0 %v2979
    %3296 = vmatprep.subr.bf16.mxu0 %v2984
    %3297 = vmatpush1.bf16.msra.mxu0 %v2983
    %3298 = vmatprep.subr.bf16.mxu0 %v2988
    %3299 = vmatpush1.bf16.msra.mxu0 %v2987
    %3300 = vmatprep.subr.bf16.mxu0 %v2992
    %3301 = vmatpush1.bf16.msra.mxu0 %v2991
    %3302 = vmatprep.subr.bf16.mxu0 %v2996
    %3303 = vmatpush1.bf16.msra.mxu0 %v2995
    %3304 = vmatprep.subr.bf16.mxu0 %v3000
    %3305 = vmatpush1.bf16.msra.mxu0 %v2999
    %3306 = vmatprep.subr.bf16.mxu0 %v3004
    %3307 = vmatpush1.bf16.msra.mxu0 %v3003
    %3308 = vmatprep.subr.bf16.mxu0 %v3008
    %3309 = vmatpush1.bf16.msra.mxu0 %v3007
    %3310 = vmatprep.subr.bf16.mxu0 %v3012
    %3311 = vmatpush1.bf16.msra.mxu0 %v3011
    %3312 = vmatprep.subr.bf16.mxu0 %v3016
    %3313 = vmatpush1.bf16.msra.mxu0 %v3015
    %3314 = vmatprep.subr.bf16.mxu0 %v3020
    %3315 = vmatpush1.bf16.msra.mxu0 %v3019
    %3316 = vmatprep.subr.bf16.mxu0 %v3024
    %3317 = vmatpush1.bf16.msra.mxu0 %v3023
    %3318 = vmatprep.subr.bf16.mxu0 %v3028
    %3319 = vmatpush1.bf16.msra.mxu0 %v3027
    %3320 = vmatprep.subr.bf16.mxu0 %v3032
    %3321 = vmatpush1.bf16.msra.mxu0 %v3031
    %3322 = vmatprep.mubr.bf16.mxu0 %v2370
    %3323 = vmatmul.mubr.bf16.gmra.mrb[0].mxu0 %v2369
    %v3324 = vpop.f32.mrb[0].mxu0
    %v3325 = vadd.f32 %v3282, %v3324
    %v3326 = vpop.f32.mrb[0].mxu0
    %v3327 = vadd.f32 %v3284, %v3326
    %v3328 = vpop.f32.mrb[0].mxu0
    %v3329 = vadd.f32 %v3286, %v3328
    %v3330 = vpop.f32.mrb[0].mxu0
    %v3331 = vadd.f32 %v3288, %v3330
    %3332 = vdwg.mxu0
    %v3333 = vmax.f32 %v3239, 0.0
    %v3334 = vmax.f32 %v3241, 0.0
    %v3335 = vmax.f32 %v3325, 0.0
    %v3336 = vmax.f32 %v3327, 0.0
    %v3337 = vmax.f32 %v3243, 0.0
    %v3338 = vmax.f32 %v3245, 0.0
    %v3339 = vmax.f32 %v3329, 0.0
    %v3340 = vmax.f32 %v3331, 0.0
    %v3341 = vld [vmem:[%s9] sm:$0xf]
    %v3342 = vunpack.c.l.bf16 %v3341
    %v3344 = vlaneseq
    %v3345 = vshrl.u32 %v3344, 7
    %v3346 = vsub.s32 0, %v3345
    %v3347 = vrot.slane %v3342, %v3346
    %v3348 = vlaneseq
    %v3349 = vshrl.u32 %v3348, 7
    %v3350 = vsub.s32 2, %v3349
    %v3351 = vrot.slane %v3342, %v3350
    %v3352 = vlaneseq
    %v3353 = vshrl.u32 %v3352, 7
    %v3354 = vsub.s32 4, %v3353
    %v3355 = vrot.slane %v3342, %v3354
    %v3356 = vlaneseq
    %v3357 = vshrl.u32 %v3356, 7
    %v3358 = vsub.s32 6, %v3357
    %v3359 = vrot.slane %v3342, %v3358
    %v3364 = vlaneseq
    %v3365 = vshrl.u32 %v3364, 7
    %v3366 = vsub.s32 0, %v3365
    %v3367 = vrot.slane %v3347, %v3366
    %v3368 = vlaneseq
    %v3369 = vshrl.u32 %v3368, 7
    %v3370 = vsub.s32 0, %v3369
    %v3371 = vrot.slane %v3351, %v3370
    %v3372 = vlaneseq
    %v3373 = vshrl.u32 %v3372, 7
    %v3374 = vsub.s32 0, %v3373
    %v3375 = vrot.slane %v3355, %v3374
    %v3376 = vlaneseq
    %v3377 = vshrl.u32 %v3376, 7
    %v3378 = vsub.s32 0, %v3377
    %v3379 = vrot.slane %v3359, %v3378
    %v3380 = vmul.f32 %v3333, %v3367
    %v3381 = vmul.f32 %v3334, %v3371
    %v3382 = vmul.f32 %v3335, %v3375
    %v3383 = vmul.f32 %v3336, %v3379
    %v3384 = vmul.f32 %v3337, %v3367
    %v3385 = vmul.f32 %v3338, %v3371
    %v3386 = vmul.f32 %v3339, %v3375
    %v3387 = vmul.f32 %v3340, %v3379
    %v3388 = vadd.f32 %v3380, %v3381
    %v3389 = vadd.f32 %v3388, %v3382
    %v3390 = vadd.f32 %v3389, %v3383
    %3391 = vadd.xlane.f32.xlu0 %v3390
    %v3392 = vpop.xlane.xlu0 %3391
    %v3393 = vadd.f32 %v3384, %v3385
    %v3394 = vadd.f32 %v3393, %v3386
    %v3395 = vadd.f32 %v3394, %v3387
    %3396 = vadd.xlane.f32.xlu0 %v3395
    %v3397 = vpop.xlane.xlu0 %3396
    %s3398 = sld [smem:[#allocation2]]
    %v3399 = vstv %s3398
    %v3400 = vadd.f32 %v3392, %v3399
    %v3401 = vadd.f32 %v3397, %v3399
    %vm3402 = vcmask 7168
    %3403 = vst.msk [vmem:[%s11] sm:$0xff] %vm3402, %v3400
    %3404 = vst.msk [vmem:[%s11 + $0x8] sm:$0xff] %vm3402, %v3401
    // Predicated region
    $region66: #{tpu_custom_call.1} parent=1 // pred_check
      _
    $region67: #{tpu_custom_call.1} parent=1 // pred_check_branch
      %3406 = sbr.rel (0) target = $region69
    $region68: #{tpu_custom_call.1} parent=1 // pred_region
      _
    $region69: #{tpu_custom_call.1} parent=1 // pred_fallthru
      _
    // Predicated region
    $region70: #{tpu_custom_call.1} parent=1 // pred_check
      _
    $region71: #{tpu_custom_call.1} parent=1 // pred_check_branch
      %3408 = sbr.rel (0) target = $region73
    $region72: #{tpu_custom_call.1} parent=1 // pred_region
      _
    $region73: #{tpu_custom_call.1} parent=1 // pred_fallthru
      _
    %3409 = vsyncpa [#allocation4], 1
    %3410 = vsyncpa [#allocation6], 1
    %3411 = vsyncpa [#allocation9], 1

</llo_original>
